<compile_context>
chip_gen: v6e
topology: v6e:2x2x1
jax: 0.10.0
libtpu: 0.0.40
codegen_flags: <defaults>
</compile_context>

<pallas_src>
import functools

import jax
import jax.numpy as jnp
from jax.experimental import pallas as pl
from jax.experimental.pallas import tpu as pltpu

MAX_TILE_ROWS = 32  # 32 rows x 128 lanes = 4096 cells per grid step


def _bce_with_logits(x, y):
    # numerically-stable BCEWithLogits (elementwise, no reduction)
    return jnp.maximum(x, 0.0) - x * y + jnp.log1p(jnp.exp(-jnp.abs(x)))


def _yolo_loss_kernel(anc_ref, pred_ref, tgt_ref, acc_ref, *,
                      cells_per_anchor, num_classes, tiles_per_split,
                      groups, acc_rows):
    """anc_ref: SMEM (A, 4) = [w, h, 1/w, 1/h];
       pred_ref: (5+C, R, 128); tgt_ref: (6, R, 128);
       acc_ref: (6, acc_rows, 128) resident accumulator (per (p, a) block)."""
    p = pl.program_id(0)
    a = pl.program_id(1)
    t = pl.program_id(2)

    @pl.when(t == 0)
    def _():
        acc_ref[...] = jnp.zeros_like(acc_ref)

    R = pred_ref.shape[1]

    # validity mask for the padded tail (replaces wrapper-side scatter)
    row = jax.lax.broadcasted_iota(jnp.int32, (R, 128), 0)
    lane = jax.lax.broadcasted_iota(jnp.int32, (R, 128), 1)
    base = (p * tiles_per_split + t) * (R * 128)
    valid = (base + row * 128 + lane) < cells_per_anchor

    # per-anchor scalars from SMEM (no per-cell anchor stream)
    aw = anc_ref[a, 0]
    ah = anc_ref[a, 1]
    inv_aw = anc_ref[a, 2]
    inv_ah = anc_ref[a, 3]

    t0 = tgt_ref[0]                      # objectness target, (R, 128)
    p0 = pred_ref[0]                     # objectness logit,  (R, 128)
    obj = valid & (t0 == 1.0)
    noobj = valid & (t0 == 0.0)

    def reduce_rows(x):                  # (R,128) -> (acc_rows,128); cross-vreg adds
        if groups == 1:
            return x
        out = x[0:acc_rows]
        for g in range(1, groups):
            out = out + x[g * acc_rows:(g + 1) * acc_rows]
        return out

    def acc_add(k, mask, term):
        acc_ref[k] += reduce_rows(jnp.where(mask, term, 0.0))

    # ---- no-object BCE-with-logits + obj / no-obj counts ----------------------
    acc_add(0, noobj, _bce_with_logits(p0, t0))
    acc_add(1, noobj, 1.0)
    acc_add(3, obj, 1.0)

    # ---- decoded box preds + midpoint IoU + object BCE ------------------------
    sx = jax.nn.sigmoid(pred_ref[1])
    sy = jax.nn.sigmoid(pred_ref[2])
    pw_raw = pred_ref[3]
    ph_raw = pred_ref[4]
    pw = jnp.exp(pw_raw) * aw
    ph = jnp.exp(ph_raw) * ah
    tx = tgt_ref[1]
    ty = tgt_ref[2]
    tw = tgt_ref[3]
    th = tgt_ref[4]

    b1x1 = sx - pw * 0.5
    b1x2 = sx + pw * 0.5
    b1y1 = sy - ph * 0.5
    b1y2 = sy + ph * 0.5
    b2x1 = tx - tw * 0.5
    b2x2 = tx + tw * 0.5
    b2y1 = ty - th * 0.5
    b2y2 = ty + th * 0.5
    iw = jnp.maximum(jnp.minimum(b1x2, b2x2) - jnp.maximum(b1x1, b2x1), 0.0)
    ih = jnp.maximum(jnp.minimum(b1y2, b2y2) - jnp.maximum(b1y1, b2y1), 0.0)
    inter = iw * ih
    a1 = jnp.abs((b1x2 - b1x1) * (b1y2 - b1y1))
    a2 = jnp.abs((b2x2 - b2x1) * (b2y2 - b2y1))
    iou = inter * pl.reciprocal(a1 + a2 - inter + 1e-6, approx=True)
    acc_add(2, obj, _bce_with_logits(p0, iou * t0))

    # ---- box MSE: (sigmoid xy, raw wh) vs (target xy, log(target wh/anchor)) --
    lw = jnp.log(1e-16 + tw * inv_aw)
    lh = jnp.log(1e-16 + th * inv_ah)
    box_sq = ((sx - tx) ** 2 + (sy - ty) ** 2
              + (pw_raw - lw) ** 2 + (ph_raw - lh) ** 2)
    acc_add(4, obj, box_sq)

    # ---- class cross-entropy (streamed logsumexp over the class rows) ---------
    cls_f = tgt_ref[5]
    m = pred_ref[5]
    for c in range(1, num_classes):
        m = jnp.maximum(m, pred_ref[5 + c])
    s = jnp.zeros_like(m)
    z_k = jnp.zeros_like(m)
    for c in range(num_classes):
        lc = pred_ref[5 + c]
        s = s + jnp.exp(lc - m)
        z_k = jnp.where(cls_f == float(c), lc, z_k)
    ce = (m - z_k) + jnp.log(s)
    acc_add(5, obj, ce)


def yolo_loss(predictions, target, anchors):
    """predictions: (B, A, S, S, 5+C), target: (B, A, S, S, 6), anchors: (A, 2)."""
    B, A, S, _, D = predictions.shape
    C = D - 5
    M = B * S * S                              # cells per anchor

    # anchor-major / feature-major / cell-minor layout
    pred_t = jnp.transpose(predictions.astype(jnp.float32),
                           (1, 4, 0, 2, 3)).reshape(A, D, M)
    tgt_t = jnp.transpose(target.astype(jnp.float32),
                          (1, 4, 0, 2, 3)).reshape(A, 6, M)

    # tile geometry
    nrows = pl.cdiv(M, 128)                    # 128-lane rows per anchor
    if nrows >= 8:
        R = min(MAX_TILE_ROWS, 8 * (nrows // 8))   # multiple of 8 sublane rows
    else:
        R = nrows
    nt_total = pl.cdiv(nrows, R)
    P = 2 if nt_total >= 2 else 1              # 2-way core split (v7x megacore)
    NT = pl.cdiv(nt_total, P)
    nrows_p = P * NT * R
    Mp = nrows_p * 128

    pad = Mp - M
    pred_p = jnp.pad(pred_t, ((0, 0), (0, 0), (0, pad))).reshape(A, D, nrows_p, 128)
    tgt_p = jnp.pad(tgt_t, ((0, 0), (0, 0), (0, pad))).reshape(A, 6, nrows_p, 128)

    AR = 8 if R % 8 == 0 else R                # accumulator rows
    G = R // AR

    anchors_f = anchors.astype(jnp.float32)
    anc_tbl = jnp.concatenate([anchors_f, 1.0 / anchors_f], axis=1)   # (A, 4)

    kernel = functools.partial(
        _yolo_loss_kernel, cells_per_anchor=M, num_classes=C,
        tiles_per_split=NT, groups=G, acc_rows=AR)

    acc = pl.pallas_call(
        kernel,
        out_shape=jax.ShapeDtypeStruct((P, A, 6, AR, 128), jnp.float32),
        grid_spec=pltpu.PrefetchScalarGridSpec(
            num_scalar_prefetch=1,
            grid=(P, A, NT),
            in_specs=[
                pl.BlockSpec((None, D, R, 128),
                             lambda p, a, t, anc: (a, 0, p * NT + t, 0)),
                pl.BlockSpec((None, 6, R, 128),
                             lambda p, a, t, anc: (a, 0, p * NT + t, 0)),
            ],
            out_specs=pl.BlockSpec((None, None, 6, AR, 128),
                                   lambda p, a, t, anc: (p, a, 0, 0, 0)),
        ),
        compiler_params=pltpu.CompilerParams(
            dimension_semantics=("parallel", "parallel", "arbitrary")),
    )(anc_tbl, pred_p, tgt_p)

    sums = jnp.sum(acc, axis=(0, 1, 3, 4))     # (6,)
    sum_noobj, cnt_noobj = sums[0], sums[1]
    sum_objbce, cnt_obj = sums[2], sums[3]
    sum_box, sum_ce = sums[4], sums[5]

    no_object_loss = sum_noobj / cnt_noobj
    object_loss = sum_objbce / cnt_obj
    box_loss = sum_box / (cnt_obj * 4.0)
    class_loss = sum_ce / cnt_obj

    # lambda_box=10, lambda_obj=1, lambda_noobj=10, lambda_class=1
    return 10.0 * box_loss + object_loss + 10.0 * no_object_loss + class_loss


# ------------------------- pure-JAX reference ---------------------------------
def ref_yolo_loss(pred, tgt, anchors):
    A = anchors.shape[0]
    obj = tgt[..., 0] == 1.0
    noobj = tgt[..., 0] == 0.0
    p0 = pred[..., 0]
    t0 = tgt[..., 0]
    n_noobj = jnp.sum(noobj).astype(jnp.float32)
    n_obj = jnp.sum(obj).astype(jnp.float32)

    no_object_loss = jnp.sum(jnp.where(noobj, _bce_with_logits(p0, t0), 0.0)) / n_noobj

    anc = anchors.reshape(1, A, 1, 1, 2)
    bxy = jax.nn.sigmoid(pred[..., 1:3])
    bwh = jnp.exp(pred[..., 3:5]) * anc
    tb = tgt[..., 1:5]
    b1x1 = bxy[..., 0] - bwh[..., 0] / 2
    b1x2 = bxy[..., 0] + bwh[..., 0] / 2
    b1y1 = bxy[..., 1] - bwh[..., 1] / 2
    b1y2 = bxy[..., 1] + bwh[..., 1] / 2
    b2x1 = tb[..., 0] - tb[..., 2] / 2
    b2x2 = tb[..., 0] + tb[..., 2] / 2
    b2y1 = tb[..., 1] - tb[..., 3] / 2
    b2y2 = tb[..., 1] + tb[..., 3] / 2
    iw = jnp.maximum(jnp.minimum(b1x2, b2x2) - jnp.maximum(b1x1, b2x1), 0.0)
    ih = jnp.maximum(jnp.minimum(b1y2, b2y2) - jnp.maximum(b1y1, b2y1), 0.0)
    inter = iw * ih
    union = (jnp.abs((b1x2 - b1x1) * (b1y2 - b1y1))
             + jnp.abs((b2x2 - b2x1) * (b2y2 - b2y1)) - inter + 1e-6)
    iou = inter / union
    object_loss = jnp.sum(jnp.where(obj, _bce_with_logits(p0, iou * t0), 0.0)) / n_obj

    pbox = jnp.concatenate([bxy, pred[..., 3:5]], axis=-1)
    tbox = jnp.concatenate([tgt[..., 1:3], jnp.log(1e-16 + tgt[..., 3:5] / anc)], axis=-1)
    box_loss = jnp.sum(jnp.where(obj[..., None], (pbox - tbox) ** 2, 0.0)) / (n_obj * 4.0)

    logits = pred[..., 5:]
    lse = jax.scipy.special.logsumexp(logits, axis=-1)
    k = tgt[..., 5].astype(jnp.int32)
    zk = jnp.take_along_axis(logits, k[..., None], axis=-1)[..., 0]
    class_loss = jnp.sum(jnp.where(obj, lse - zk, 0.0)) / n_obj

    return 10.0 * box_loss + object_loss + 10.0 * no_object_loss + class_loss


def _make_inputs(key, B, A, S, C):
    D = 5 + C
    k1, k2, k3, k4, k5 = jax.random.split(key, 5)
    predictions = jax.random.normal(k1, (B, A, S, S, D), dtype=jnp.float32)
    objness = (jax.random.uniform(k2, (B, A, S, S)) < 0.3).astype(jnp.float32)
    xy = jax.random.uniform(k3, (B, A, S, S, 2), minval=0.05, maxval=0.95)
    wh = jax.random.uniform(k4, (B, A, S, S, 2), minval=0.1, maxval=2.0)
    cls = jax.random.randint(k5, (B, A, S, S), 0, C).astype(jnp.float32)
    target = jnp.concatenate([objness[..., None], xy, wh, cls[..., None]], axis=-1)
    return predictions, target


if __name__ == "__main__":
    anchors = jnp.array([[0.28, 0.22], [0.38, 0.48], [0.90, 0.78]], dtype=jnp.float32)
    key = jax.random.PRNGKey(0)
    k_small, k_big = jax.random.split(key)

    # small shapes: exercise the single-tile (R < 8) path
    pred_s, tgt_s = _make_inputs(k_small, 2, 3, 8, 20)
    loss_s = jax.block_until_ready(yolo_loss(pred_s, tgt_s, anchors))
    ref_s = ref_yolo_loss(pred_s, tgt_s, anchors)
    assert jnp.isfinite(loss_s), loss_s
    assert jnp.allclose(loss_s, ref_s, rtol=1e-4, atol=1e-4), (loss_s, ref_s)

    # mid-size shapes: exercise 32x128 tiles, tail masking and the 2-way core split
    pred_b, tgt_b = _make_inputs(k_big, 2, 3, 52, 20)
    loss_b = jax.block_until_ready(yolo_loss(pred_b, tgt_b, anchors))
    ref_b = ref_yolo_loss(pred_b, tgt_b, anchors)
    assert jnp.isfinite(loss_b), loss_b
    assert jnp.allclose(loss_b, ref_b, rtol=1e-4, atol=1e-4), (loss_b, ref_b)

    print("KERNEL_OK")
</pallas_src>

<mosaic_0001>
module attributes {stable_mosaic.version = 11 : i64} {
  func.func @_yolo_loss_kernel(%arg0: i32, %arg1: i32, %arg2: i32, %arg3: memref<3x4xf32, #tpu.memory_space<smem>>, %arg4: memref<1x25x1x128xf32, #tpu.memory_space<vmem>>, %arg5: memref<1x6x1x128xf32, #tpu.memory_space<vmem>>, %arg6: memref<1x1x6x1x128xf32, #tpu.memory_space<vmem>>) attributes {dimension_semantics = [#tpu.dimension_semantics<parallel>, #tpu.dimension_semantics<parallel>, #tpu.dimension_semantics<arbitrary>], iteration_bounds = array<i64: 1, 3, 1>, scalar_prefetch = 1 : i64, scratch_operands = 0 : i64, tpu.core_type = #tpu.core_type<tc>, window_params = [{transform_indices = @transform_0, window_bounds = array<i64: 1, 25, 1, 128>}, {transform_indices = @transform_1, window_bounds = array<i64: 1, 6, 1, 128>}, {transform_indices = @transform_2, window_bounds = array<i64: 1, 1, 6, 1, 128>}]} {
    %c0_i32 = arith.constant 0 : i32
    %0 = arith.cmpi eq, %arg2, %c0_i32 : i32
    %1 = arith.extui %0 : i1 to i32
    %c0_i32_0 = arith.constant 0 : i32
    %2 = arith.cmpi ne, %1, %c0_i32_0 : i32
    scf.if %2 {
      %cst_296 = arith.constant 0.000000e+00 : f32
      %432 = vector.broadcast %cst_296 : f32 to vector<6x1x128xf32>
      %c0_297 = arith.constant 0 : index
      %c0_298 = arith.constant 0 : index
      %c0_299 = arith.constant 0 : index
      %c0_300 = arith.constant 0 : index
      %c0_301 = arith.constant 0 : index
      %433 = vector.load %arg6[%c0_297, %c0_298, %c0_299, %c0_300, %c0_301] : memref<1x1x6x1x128xf32, #tpu.memory_space<vmem>>, vector<1x1x6x1x128xf32>
      %434 = vector.shape_cast %433 : vector<1x1x6x1x128xf32> to vector<6x1x128xf32>
      %435 = vector.shape_cast %432 : vector<6x1x128xf32> to vector<1x1x6x1x128xf32>
      tpu.vector_store %arg6[%c0_297, %c0_298, %c0_299, %c0_300, %c0_301], %435 {strides = array<i32>} : memref<1x1x6x1x128xf32, #tpu.memory_space<vmem>>, vector<1x1x6x1x128xf32>,
    } else {
    }
    %3 = tpu.iota {dimensions = array<i32: 0>} : vector<1x128xi32>
    %4 = tpu.iota {dimensions = array<i32: 1>} : vector<1x128xi32>
    %c1_i32 = arith.constant 1 : i32
    %5 = arith.muli %arg0, %c1_i32 : i32
    %6 = arith.addi %5, %arg2 : i32
    %c128_i32 = arith.constant 128 : i32
    %7 = arith.muli %6, %c128_i32 : i32
    %c128_i32_1 = arith.constant 128 : i32
    %8 = vector.broadcast %c128_i32_1 : i32 to vector<1x128xi32>
    %9 = arith.muli %3, %8 : vector<1x128xi32>
    %10 = vector.broadcast %7 : i32 to vector<1x128xi32>
    %11 = arith.addi %10, %9 : vector<1x128xi32>
    %12 = arith.addi %11, %4 : vector<1x128xi32>
    %c128_i32_2 = arith.constant 128 : i32
    %13 = vector.broadcast %c128_i32_2 : i32 to vector<1x128xi32>
    %14 = arith.cmpi slt, %12, %13 : vector<1x128xi32>
    %15 = arith.index_cast %arg1 : i32 to index
    %c0 = arith.constant 0 : index
    %16 = memref.load %arg3[%15, %c0] : memref<3x4xf32, #tpu.memory_space<smem>>
    %17 = arith.index_cast %arg1 : i32 to index
    %c1 = arith.constant 1 : index
    %18 = memref.load %arg3[%17, %c1] : memref<3x4xf32, #tpu.memory_space<smem>>
    %19 = arith.index_cast %arg1 : i32 to index
    %c2 = arith.constant 2 : index
    %20 = memref.load %arg3[%19, %c2] : memref<3x4xf32, #tpu.memory_space<smem>>
    %21 = arith.index_cast %arg1 : i32 to index
    %c3 = arith.constant 3 : index
    %22 = memref.load %arg3[%21, %c3] : memref<3x4xf32, #tpu.memory_space<smem>>
    %c0_3 = arith.constant 0 : index
    %c0_4 = arith.constant 0 : index
    %c0_5 = arith.constant 0 : index
    %c0_6 = arith.constant 0 : index
    %23 = vector.load %arg5[%c0_3, %c0_4, %c0_5, %c0_6] : memref<1x6x1x128xf32, #tpu.memory_space<vmem>>, vector<1x1x1x128xf32>
    %24 = vector.shape_cast %23 : vector<1x1x1x128xf32> to vector<1x128xf32>
    %c0_7 = arith.constant 0 : index
    %c0_8 = arith.constant 0 : index
    %c0_9 = arith.constant 0 : index
    %c0_10 = arith.constant 0 : index
    %25 = vector.load %arg4[%c0_7, %c0_8, %c0_9, %c0_10] : memref<1x25x1x128xf32, #tpu.memory_space<vmem>>, vector<1x1x1x128xf32>
    %26 = vector.shape_cast %25 : vector<1x1x1x128xf32> to vector<1x128xf32>
    %cst = arith.constant 1.000000e+00 : f32
    %27 = vector.broadcast %cst : f32 to vector<1x128xf32>
    %28 = arith.cmpf oeq, %24, %27 : vector<1x128xf32>
    %29 = arith.andi %14, %28 : vector<1x128xi1>
    %cst_11 = arith.constant 0.000000e+00 : f32
    %30 = vector.broadcast %cst_11 : f32 to vector<1x128xf32>
    %31 = arith.cmpf oeq, %24, %30 : vector<1x128xf32>
    %32 = arith.andi %14, %31 : vector<1x128xi1>
    %cst_12 = arith.constant 0.000000e+00 : f32
    %33 = vector.broadcast %cst_12 : f32 to vector<1x128xf32>
    %34 = arith.maximumf %26, %33 : vector<1x128xf32>
    %35 = arith.mulf %26, %24 : vector<1x128xf32>
    %36 = arith.subf %34, %35 : vector<1x128xf32>
    %37 = math.absf %26 : vector<1x128xf32>
    %cst_13 = arith.constant 0.000000e+00 : f32
    %38 = vector.broadcast %cst_13 : f32 to vector<1x128xf32>
    %39 = arith.subf %38, %37 : vector<1x128xf32>
    %40 = math.exp %39 : vector<1x128xf32>
    %41 = math.log1p %40 : vector<1x128xf32>
    %42 = arith.addf %36, %41 : vector<1x128xf32>
    %c0_14 = arith.constant 0 : index
    %c0_15 = arith.constant 0 : index
    %c0_16 = arith.constant 0 : index
    %c0_17 = arith.constant 0 : index
    %c0_18 = arith.constant 0 : index
    %43 = vector.load %arg6[%c0_14, %c0_15, %c0_16, %c0_17, %c0_18] : memref<1x1x6x1x128xf32, #tpu.memory_space<vmem>>, vector<1x1x1x1x128xf32>
    %44 = vector.shape_cast %43 : vector<1x1x1x1x128xf32> to vector<1x128xf32>
    %cst_19 = arith.constant 0.000000e+00 : f32
    %45 = vector.broadcast %cst_19 : f32 to vector<1x128xf32>
    %46 = arith.select %32, %42, %45 : vector<1x128xi1>, vector<1x128xf32>
    %47 = arith.addf %44, %46 : vector<1x128xf32>
    %c0_20 = arith.constant 0 : index
    %c0_21 = arith.constant 0 : index
    %c0_22 = arith.constant 0 : index
    %c0_23 = arith.constant 0 : index
    %c0_24 = arith.constant 0 : index
    %48 = vector.load %arg6[%c0_20, %c0_21, %c0_22, %c0_23, %c0_24] : memref<1x1x6x1x128xf32, #tpu.memory_space<vmem>>, vector<1x1x1x1x128xf32>
    %49 = vector.shape_cast %48 : vector<1x1x1x1x128xf32> to vector<1x128xf32>
    %50 = vector.shape_cast %47 : vector<1x128xf32> to vector<1x1x1x1x128xf32>
    tpu.vector_store %arg6[%c0_20, %c0_21, %c0_22, %c0_23, %c0_24], %50 {strides = array<i32>} : memref<1x1x6x1x128xf32, #tpu.memory_space<vmem>>, vector<1x1x1x1x128xf32>,
    %c0_25 = arith.constant 0 : index
    %c0_26 = arith.constant 0 : index
    %c1_27 = arith.constant 1 : index
    %c0_28 = arith.constant 0 : index
    %c0_29 = arith.constant 0 : index
    %51 = vector.load %arg6[%c0_25, %c0_26, %c1_27, %c0_28, %c0_29] : memref<1x1x6x1x128xf32, #tpu.memory_space<vmem>>, vector<1x1x1x1x128xf32>
    %52 = vector.shape_cast %51 : vector<1x1x1x1x128xf32> to vector<1x128xf32>
    %cst_30 = arith.constant 1.000000e+00 : f32
    %cst_31 = arith.constant 0.000000e+00 : f32
    %53 = vector.broadcast %cst_30 : f32 to vector<1x128xf32>
    %54 = vector.broadcast %cst_31 : f32 to vector<1x128xf32>
    %55 = arith.select %32, %53, %54 : vector<1x128xi1>, vector<1x128xf32>
    %56 = arith.addf %52, %55 : vector<1x128xf32>
    %c0_32 = arith.constant 0 : index
    %c0_33 = arith.constant 0 : index
    %c1_34 = arith.constant 1 : index
    %c0_35 = arith.constant 0 : index
    %c0_36 = arith.constant 0 : index
    %57 = vector.load %arg6[%c0_32, %c0_33, %c1_34, %c0_35, %c0_36] : memref<1x1x6x1x128xf32, #tpu.memory_space<vmem>>, vector<1x1x1x1x128xf32>
    %58 = vector.shape_cast %57 : vector<1x1x1x1x128xf32> to vector<1x128xf32>
    %59 = vector.shape_cast %56 : vector<1x128xf32> to vector<1x1x1x1x128xf32>
    tpu.vector_store %arg6[%c0_32, %c0_33, %c1_34, %c0_35, %c0_36], %59 {strides = array<i32>} : memref<1x1x6x1x128xf32, #tpu.memory_space<vmem>>, vector<1x1x1x1x128xf32>,
    %c0_37 = arith.constant 0 : index
    %c0_38 = arith.constant 0 : index
    %c3_39 = arith.constant 3 : index
    %c0_40 = arith.constant 0 : index
    %c0_41 = arith.constant 0 : index
    %60 = vector.load %arg6[%c0_37, %c0_38, %c3_39, %c0_40, %c0_41] : memref<1x1x6x1x128xf32, #tpu.memory_space<vmem>>, vector<1x1x1x1x128xf32>
    %61 = vector.shape_cast %60 : vector<1x1x1x1x128xf32> to vector<1x128xf32>
    %cst_42 = arith.constant 1.000000e+00 : f32
    %cst_43 = arith.constant 0.000000e+00 : f32
    %62 = vector.broadcast %cst_42 : f32 to vector<1x128xf32>
    %63 = vector.broadcast %cst_43 : f32 to vector<1x128xf32>
    %64 = arith.select %29, %62, %63 : vector<1x128xi1>, vector<1x128xf32>
    %65 = arith.addf %61, %64 : vector<1x128xf32>
    %c0_44 = arith.constant 0 : index
    %c0_45 = arith.constant 0 : index
    %c3_46 = arith.constant 3 : index
    %c0_47 = arith.constant 0 : index
    %c0_48 = arith.constant 0 : index
    %66 = vector.load %arg6[%c0_44, %c0_45, %c3_46, %c0_47, %c0_48] : memref<1x1x6x1x128xf32, #tpu.memory_space<vmem>>, vector<1x1x1x1x128xf32>
    %67 = vector.shape_cast %66 : vector<1x1x1x1x128xf32> to vector<1x128xf32>
    %68 = vector.shape_cast %65 : vector<1x128xf32> to vector<1x1x1x1x128xf32>
    tpu.vector_store %arg6[%c0_44, %c0_45, %c3_46, %c0_47, %c0_48], %68 {strides = array<i32>} : memref<1x1x6x1x128xf32, #tpu.memory_space<vmem>>, vector<1x1x1x1x128xf32>,
    %c0_49 = arith.constant 0 : index
    %c1_50 = arith.constant 1 : index
    %c0_51 = arith.constant 0 : index
    %c0_52 = arith.constant 0 : index
    %69 = vector.load %arg4[%c0_49, %c1_50, %c0_51, %c0_52] : memref<1x25x1x128xf32, #tpu.memory_space<vmem>>, vector<1x1x1x128xf32>
    %70 = vector.shape_cast %69 : vector<1x1x1x128xf32> to vector<1x128xf32>
    %71 = arith.negf %70 : vector<1x128xf32>
    %72 = math.exp %71 : vector<1x128xf32>
    %cst_53 = arith.constant 1.000000e+00 : f32
    %73 = vector.broadcast %cst_53 : f32 to vector<1x128xf32>
    %74 = arith.addf %73, %72 : vector<1x128xf32>
    %75 = arith.divf %73, %74 : vector<1x128xf32>
    %c0_54 = arith.constant 0 : index
    %c2_55 = arith.constant 2 : index
    %c0_56 = arith.constant 0 : index
    %c0_57 = arith.constant 0 : index
    %76 = vector.load %arg4[%c0_54, %c2_55, %c0_56, %c0_57] : memref<1x25x1x128xf32, #tpu.memory_space<vmem>>, vector<1x1x1x128xf32>
    %77 = vector.shape_cast %76 : vector<1x1x1x128xf32> to vector<1x128xf32>
    %78 = arith.negf %77 : vector<1x128xf32>
    %79 = math.exp %78 : vector<1x128xf32>
    %cst_58 = arith.constant 1.000000e+00 : f32
    %80 = vector.broadcast %cst_58 : f32 to vector<1x128xf32>
    %81 = arith.addf %80, %79 : vector<1x128xf32>
    %82 = arith.divf %80, %81 : vector<1x128xf32>
    %c0_59 = arith.constant 0 : index
    %c3_60 = arith.constant 3 : index
    %c0_61 = arith.constant 0 : index
    %c0_62 = arith.constant 0 : index
    %83 = vector.load %arg4[%c0_59, %c3_60, %c0_61, %c0_62] : memref<1x25x1x128xf32, #tpu.memory_space<vmem>>, vector<1x1x1x128xf32>
    %84 = vector.shape_cast %83 : vector<1x1x1x128xf32> to vector<1x128xf32>
    %c0_63 = arith.constant 0 : index
    %c4 = arith.constant 4 : index
    %c0_64 = arith.constant 0 : index
    %c0_65 = arith.constant 0 : index
    %85 = vector.load %arg4[%c0_63, %c4, %c0_64, %c0_65] : memref<1x25x1x128xf32, #tpu.memory_space<vmem>>, vector<1x1x1x128xf32>
    %86 = vector.shape_cast %85 : vector<1x1x1x128xf32> to vector<1x128xf32>
    %87 = math.exp %84 : vector<1x128xf32>
    %88 = vector.broadcast %16 : f32 to vector<1x128xf32>
    %89 = arith.mulf %87, %88 : vector<1x128xf32>
    %90 = math.exp %86 : vector<1x128xf32>
    %91 = vector.broadcast %18 : f32 to vector<1x128xf32>
    %92 = arith.mulf %90, %91 : vector<1x128xf32>
    %c0_66 = arith.constant 0 : index
    %c1_67 = arith.constant 1 : index
    %c0_68 = arith.constant 0 : index
    %c0_69 = arith.constant 0 : index
    %93 = vector.load %arg5[%c0_66, %c1_67, %c0_68, %c0_69] : memref<1x6x1x128xf32, #tpu.memory_space<vmem>>, vector<1x1x1x128xf32>
    %94 = vector.shape_cast %93 : vector<1x1x1x128xf32> to vector<1x128xf32>
    %c0_70 = arith.constant 0 : index
    %c2_71 = arith.constant 2 : index
    %c0_72 = arith.constant 0 : index
    %c0_73 = arith.constant 0 : index
    %95 = vector.load %arg5[%c0_70, %c2_71, %c0_72, %c0_73] : memref<1x6x1x128xf32, #tpu.memory_space<vmem>>, vector<1x1x1x128xf32>
    %96 = vector.shape_cast %95 : vector<1x1x1x128xf32> to vector<1x128xf32>
    %c0_74 = arith.constant 0 : index
    %c3_75 = arith.constant 3 : index
    %c0_76 = arith.constant 0 : index
    %c0_77 = arith.constant 0 : index
    %97 = vector.load %arg5[%c0_74, %c3_75, %c0_76, %c0_77] : memref<1x6x1x128xf32, #tpu.memory_space<vmem>>, vector<1x1x1x128xf32>
    %98 = vector.shape_cast %97 : vector<1x1x1x128xf32> to vector<1x128xf32>
    %c0_78 = arith.constant 0 : index
    %c4_79 = arith.constant 4 : index
    %c0_80 = arith.constant 0 : index
    %c0_81 = arith.constant 0 : index
    %99 = vector.load %arg5[%c0_78, %c4_79, %c0_80, %c0_81] : memref<1x6x1x128xf32, #tpu.memory_space<vmem>>, vector<1x1x1x128xf32>
    %100 = vector.shape_cast %99 : vector<1x1x1x128xf32> to vector<1x128xf32>
    %cst_82 = arith.constant 5.000000e-01 : f32
    %101 = vector.broadcast %cst_82 : f32 to vector<1x128xf32>
    %102 = arith.mulf %89, %101 : vector<1x128xf32>
    %103 = arith.subf %75, %102 : vector<1x128xf32>
    %cst_83 = arith.constant 5.000000e-01 : f32
    %104 = vector.broadcast %cst_83 : f32 to vector<1x128xf32>
    %105 = arith.mulf %89, %104 : vector<1x128xf32>
    %106 = arith.addf %75, %105 : vector<1x128xf32>
    %cst_84 = arith.constant 5.000000e-01 : f32
    %107 = vector.broadcast %cst_84 : f32 to vector<1x128xf32>
    %108 = arith.mulf %92, %107 : vector<1x128xf32>
    %109 = arith.subf %82, %108 : vector<1x128xf32>
    %cst_85 = arith.constant 5.000000e-01 : f32
    %110 = vector.broadcast %cst_85 : f32 to vector<1x128xf32>
    %111 = arith.mulf %92, %110 : vector<1x128xf32>
    %112 = arith.addf %82, %111 : vector<1x128xf32>
    %cst_86 = arith.constant 5.000000e-01 : f32
    %113 = vector.broadcast %cst_86 : f32 to vector<1x128xf32>
    %114 = arith.mulf %98, %113 : vector<1x128xf32>
    %115 = arith.subf %94, %114 : vector<1x128xf32>
    %cst_87 = arith.constant 5.000000e-01 : f32
    %116 = vector.broadcast %cst_87 : f32 to vector<1x128xf32>
    %117 = arith.mulf %98, %116 : vector<1x128xf32>
    %118 = arith.addf %94, %117 : vector<1x128xf32>
    %cst_88 = arith.constant 5.000000e-01 : f32
    %119 = vector.broadcast %cst_88 : f32 to vector<1x128xf32>
    %120 = arith.mulf %100, %119 : vector<1x128xf32>
    %121 = arith.subf %96, %120 : vector<1x128xf32>
    %cst_89 = arith.constant 5.000000e-01 : f32
    %122 = vector.broadcast %cst_89 : f32 to vector<1x128xf32>
    %123 = arith.mulf %100, %122 : vector<1x128xf32>
    %124 = arith.addf %96, %123 : vector<1x128xf32>
    %125 = arith.minimumf %106, %118 : vector<1x128xf32>
    %126 = arith.maximumf %103, %115 : vector<1x128xf32>
    %127 = arith.subf %125, %126 : vector<1x128xf32>
    %cst_90 = arith.constant 0.000000e+00 : f32
    %128 = vector.broadcast %cst_90 : f32 to vector<1x128xf32>
    %129 = arith.maximumf %127, %128 : vector<1x128xf32>
    %130 = arith.minimumf %112, %124 : vector<1x128xf32>
    %131 = arith.maximumf %109, %121 : vector<1x128xf32>
    %132 = arith.subf %130, %131 : vector<1x128xf32>
    %cst_91 = arith.constant 0.000000e+00 : f32
    %133 = vector.broadcast %cst_91 : f32 to vector<1x128xf32>
    %134 = arith.maximumf %132, %133 : vector<1x128xf32>
    %135 = arith.mulf %129, %134 : vector<1x128xf32>
    %136 = arith.subf %106, %103 : vector<1x128xf32>
    %137 = arith.subf %112, %109 : vector<1x128xf32>
    %138 = arith.mulf %136, %137 : vector<1x128xf32>
    %139 = math.absf %138 : vector<1x128xf32>
    %140 = arith.subf %118, %115 : vector<1x128xf32>
    %141 = arith.subf %124, %121 : vector<1x128xf32>
    %142 = arith.mulf %140, %141 : vector<1x128xf32>
    %143 = math.absf %142 : vector<1x128xf32>
    %144 = arith.addf %139, %143 : vector<1x128xf32>
    %145 = arith.subf %144, %135 : vector<1x128xf32>
    %cst_92 = arith.constant 9.99999997E-7 : f32
    %146 = vector.broadcast %cst_92 : f32 to vector<1x128xf32>
    %147 = arith.addf %145, %146 : vector<1x128xf32>
    %148 = tpu.reciprocal %147 {approx = true} : vector<1x128xf32> -> vector<1x128xf32>
    %149 = arith.mulf %135, %148 : vector<1x128xf32>
    %150 = arith.mulf %149, %24 : vector<1x128xf32>
    %cst_93 = arith.constant 0.000000e+00 : f32
    %151 = vector.broadcast %cst_93 : f32 to vector<1x128xf32>
    %152 = arith.maximumf %26, %151 : vector<1x128xf32>
    %153 = arith.mulf %26, %150 : vector<1x128xf32>
    %154 = arith.subf %152, %153 : vector<1x128xf32>
    %155 = math.absf %26 : vector<1x128xf32>
    %cst_94 = arith.constant 0.000000e+00 : f32
    %156 = vector.broadcast %cst_94 : f32 to vector<1x128xf32>
    %157 = arith.subf %156, %155 : vector<1x128xf32>
    %158 = math.exp %157 : vector<1x128xf32>
    %159 = math.log1p %158 : vector<1x128xf32>
    %160 = arith.addf %154, %159 : vector<1x128xf32>
    %c0_95 = arith.constant 0 : index
    %c0_96 = arith.constant 0 : index
    %c2_97 = arith.constant 2 : index
    %c0_98 = arith.constant 0 : index
    %c0_99 = arith.constant 0 : index
    %161 = vector.load %arg6[%c0_95, %c0_96, %c2_97, %c0_98, %c0_99] : memref<1x1x6x1x128xf32, #tpu.memory_space<vmem>>, vector<1x1x1x1x128xf32>
    %162 = vector.shape_cast %161 : vector<1x1x1x1x128xf32> to vector<1x128xf32>
    %cst_100 = arith.constant 0.000000e+00 : f32
    %163 = vector.broadcast %cst_100 : f32 to vector<1x128xf32>
    %164 = arith.select %29, %160, %163 : vector<1x128xi1>, vector<1x128xf32>
    %165 = arith.addf %162, %164 : vector<1x128xf32>
    %c0_101 = arith.constant 0 : index
    %c0_102 = arith.constant 0 : index
    %c2_103 = arith.constant 2 : index
    %c0_104 = arith.constant 0 : index
    %c0_105 = arith.constant 0 : index
    %166 = vector.load %arg6[%c0_101, %c0_102, %c2_103, %c0_104, %c0_105] : memref<1x1x6x1x128xf32, #tpu.memory_space<vmem>>, vector<1x1x1x1x128xf32>
    %167 = vector.shape_cast %166 : vector<1x1x1x1x128xf32> to vector<1x128xf32>
    %168 = vector.shape_cast %165 : vector<1x128xf32> to vector<1x1x1x1x128xf32>
    tpu.vector_store %arg6[%c0_101, %c0_102, %c2_103, %c0_104, %c0_105], %168 {strides = array<i32>} : memref<1x1x6x1x128xf32, #tpu.memory_space<vmem>>, vector<1x1x1x1x128xf32>,
    %169 = vector.broadcast %20 : f32 to vector<1x128xf32>
    %170 = arith.mulf %98, %169 : vector<1x128xf32>
    %cst_106 = arith.constant 1.000000e-16 : f32
    %171 = vector.broadcast %cst_106 : f32 to vector<1x128xf32>
    %172 = arith.addf %171, %170 : vector<1x128xf32>
    %173 = math.log %172 : vector<1x128xf32>
    %174 = vector.broadcast %22 : f32 to vector<1x128xf32>
    %175 = arith.mulf %100, %174 : vector<1x128xf32>
    %cst_107 = arith.constant 1.000000e-16 : f32
    %176 = vector.broadcast %cst_107 : f32 to vector<1x128xf32>
    %177 = arith.addf %176, %175 : vector<1x128xf32>
    %178 = math.log %177 : vector<1x128xf32>
    %179 = arith.subf %75, %94 : vector<1x128xf32>
    %180 = arith.mulf %179, %179 : vector<1x128xf32>
    %181 = arith.subf %82, %96 : vector<1x128xf32>
    %182 = arith.mulf %181, %181 : vector<1x128xf32>
    %183 = arith.addf %180, %182 : vector<1x128xf32>
    %184 = arith.subf %84, %173 : vector<1x128xf32>
    %185 = arith.mulf %184, %184 : vector<1x128xf32>
    %186 = arith.addf %183, %185 : vector<1x128xf32>
    %187 = arith.subf %86, %178 : vector<1x128xf32>
    %188 = arith.mulf %187, %187 : vector<1x128xf32>
    %189 = arith.addf %186, %188 : vector<1x128xf32>
    %c0_108 = arith.constant 0 : index
    %c0_109 = arith.constant 0 : index
    %c4_110 = arith.constant 4 : index
    %c0_111 = arith.constant 0 : index
    %c0_112 = arith.constant 0 : index
    %190 = vector.load %arg6[%c0_108, %c0_109, %c4_110, %c0_111, %c0_112] : memref<1x1x6x1x128xf32, #tpu.memory_space<vmem>>, vector<1x1x1x1x128xf32>
    %191 = vector.shape_cast %190 : vector<1x1x1x1x128xf32> to vector<1x128xf32>
    %cst_113 = arith.constant 0.000000e+00 : f32
    %192 = vector.broadcast %cst_113 : f32 to vector<1x128xf32>
    %193 = arith.select %29, %189, %192 : vector<1x128xi1>, vector<1x128xf32>
    %194 = arith.addf %191, %193 : vector<1x128xf32>
    %c0_114 = arith.constant 0 : index
    %c0_115 = arith.constant 0 : index
    %c4_116 = arith.constant 4 : index
    %c0_117 = arith.constant 0 : index
    %c0_118 = arith.constant 0 : index
    %195 = vector.load %arg6[%c0_114, %c0_115, %c4_116, %c0_117, %c0_118] : memref<1x1x6x1x128xf32, #tpu.memory_space<vmem>>, vector<1x1x1x1x128xf32>
    %196 = vector.shape_cast %195 : vector<1x1x1x1x128xf32> to vector<1x128xf32>
    %197 = vector.shape_cast %194 : vector<1x128xf32> to vector<1x1x1x1x128xf32>
    tpu.vector_store %arg6[%c0_114, %c0_115, %c4_116, %c0_117, %c0_118], %197 {strides = array<i32>} : memref<1x1x6x1x128xf32, #tpu.memory_space<vmem>>, vector<1x1x1x1x128xf32>,
    %c0_119 = arith.constant 0 : index
    %c5 = arith.constant 5 : index
    %c0_120 = arith.constant 0 : index
    %c0_121 = arith.constant 0 : index
    %198 = vector.load %arg5[%c0_119, %c5, %c0_120, %c0_121] : memref<1x6x1x128xf32, #tpu.memory_space<vmem>>, vector<1x1x1x128xf32>
    %199 = vector.shape_cast %198 : vector<1x1x1x128xf32> to vector<1x128xf32>
    %c0_122 = arith.constant 0 : index
    %c5_123 = arith.constant 5 : index
    %c0_124 = arith.constant 0 : index
    %c0_125 = arith.constant 0 : index
    %200 = vector.load %arg4[%c0_122, %c5_123, %c0_124, %c0_125] : memref<1x25x1x128xf32, #tpu.memory_space<vmem>>, vector<1x1x1x128xf32>
    %201 = vector.shape_cast %200 : vector<1x1x1x128xf32> to vector<1x128xf32>
    %c0_126 = arith.constant 0 : index
    %c6 = arith.constant 6 : index
    %c0_127 = arith.constant 0 : index
    %c0_128 = arith.constant 0 : index
    %202 = vector.load %arg4[%c0_126, %c6, %c0_127, %c0_128] : memref<1x25x1x128xf32, #tpu.memory_space<vmem>>, vector<1x1x1x128xf32>
    %203 = vector.shape_cast %202 : vector<1x1x1x128xf32> to vector<1x128xf32>
    %204 = arith.maximumf %201, %203 : vector<1x128xf32>
    %c0_129 = arith.constant 0 : index
    %c7 = arith.constant 7 : index
    %c0_130 = arith.constant 0 : index
    %c0_131 = arith.constant 0 : index
    %205 = vector.load %arg4[%c0_129, %c7, %c0_130, %c0_131] : memref<1x25x1x128xf32, #tpu.memory_space<vmem>>, vector<1x1x1x128xf32>
    %206 = vector.shape_cast %205 : vector<1x1x1x128xf32> to vector<1x128xf32>
    %207 = arith.maximumf %204, %206 : vector<1x128xf32>
    %c0_132 = arith.constant 0 : index
    %c8 = arith.constant 8 : index
    %c0_133 = arith.constant 0 : index
    %c0_134 = arith.constant 0 : index
    %208 = vector.load %arg4[%c0_132, %c8, %c0_133, %c0_134] : memref<1x25x1x128xf32, #tpu.memory_space<vmem>>, vector<1x1x1x128xf32>
    %209 = vector.shape_cast %208 : vector<1x1x1x128xf32> to vector<1x128xf32>
    %210 = arith.maximumf %207, %209 : vector<1x128xf32>
    %c0_135 = arith.constant 0 : index
    %c9 = arith.constant 9 : index
    %c0_136 = arith.constant 0 : index
    %c0_137 = arith.constant 0 : index
    %211 = vector.load %arg4[%c0_135, %c9, %c0_136, %c0_137] : memref<1x25x1x128xf32, #tpu.memory_space<vmem>>, vector<1x1x1x128xf32>
    %212 = vector.shape_cast %211 : vector<1x1x1x128xf32> to vector<1x128xf32>
    %213 = arith.maximumf %210, %212 : vector<1x128xf32>
    %c0_138 = arith.constant 0 : index
    %c10 = arith.constant 10 : index
    %c0_139 = arith.constant 0 : index
    %c0_140 = arith.constant 0 : index
    %214 = vector.load %arg4[%c0_138, %c10, %c0_139, %c0_140] : memref<1x25x1x128xf32, #tpu.memory_space<vmem>>, vector<1x1x1x128xf32>
    %215 = vector.shape_cast %214 : vector<1x1x1x128xf32> to vector<1x128xf32>
    %216 = arith.maximumf %213, %215 : vector<1x128xf32>
    %c0_141 = arith.constant 0 : index
    %c11 = arith.constant 11 : index
    %c0_142 = arith.constant 0 : index
    %c0_143 = arith.constant 0 : index
    %217 = vector.load %arg4[%c0_141, %c11, %c0_142, %c0_143] : memref<1x25x1x128xf32, #tpu.memory_space<vmem>>, vector<1x1x1x128xf32>
    %218 = vector.shape_cast %217 : vector<1x1x1x128xf32> to vector<1x128xf32>
    %219 = arith.maximumf %216, %218 : vector<1x128xf32>
    %c0_144 = arith.constant 0 : index
    %c12 = arith.constant 12 : index
    %c0_145 = arith.constant 0 : index
    %c0_146 = arith.constant 0 : index
    %220 = vector.load %arg4[%c0_144, %c12, %c0_145, %c0_146] : memref<1x25x1x128xf32, #tpu.memory_space<vmem>>, vector<1x1x1x128xf32>
    %221 = vector.shape_cast %220 : vector<1x1x1x128xf32> to vector<1x128xf32>
    %222 = arith.maximumf %219, %221 : vector<1x128xf32>
    %c0_147 = arith.constant 0 : index
    %c13 = arith.constant 13 : index
    %c0_148 = arith.constant 0 : index
    %c0_149 = arith.constant 0 : index
    %223 = vector.load %arg4[%c0_147, %c13, %c0_148, %c0_149] : memref<1x25x1x128xf32, #tpu.memory_space<vmem>>, vector<1x1x1x128xf32>
    %224 = vector.shape_cast %223 : vector<1x1x1x128xf32> to vector<1x128xf32>
    %225 = arith.maximumf %222, %224 : vector<1x128xf32>
    %c0_150 = arith.constant 0 : index
    %c14 = arith.constant 14 : index
    %c0_151 = arith.constant 0 : index
    %c0_152 = arith.constant 0 : index
    %226 = vector.load %arg4[%c0_150, %c14, %c0_151, %c0_152] : memref<1x25x1x128xf32, #tpu.memory_space<vmem>>, vector<1x1x1x128xf32>
    %227 = vector.shape_cast %226 : vector<1x1x1x128xf32> to vector<1x128xf32>
    %228 = arith.maximumf %225, %227 : vector<1x128xf32>
    %c0_153 = arith.constant 0 : index
    %c15 = arith.constant 15 : index
    %c0_154 = arith.constant 0 : index
    %c0_155 = arith.constant 0 : index
    %229 = vector.load %arg4[%c0_153, %c15, %c0_154, %c0_155] : memref<1x25x1x128xf32, #tpu.memory_space<vmem>>, vector<1x1x1x128xf32>
    %230 = vector.shape_cast %229 : vector<1x1x1x128xf32> to vector<1x128xf32>
    %231 = arith.maximumf %228, %230 : vector<1x128xf32>
    %c0_156 = arith.constant 0 : index
    %c16 = arith.constant 16 : index
    %c0_157 = arith.constant 0 : index
    %c0_158 = arith.constant 0 : index
    %232 = vector.load %arg4[%c0_156, %c16, %c0_157, %c0_158] : memref<1x25x1x128xf32, #tpu.memory_space<vmem>>, vector<1x1x1x128xf32>
    %233 = vector.shape_cast %232 : vector<1x1x1x128xf32> to vector<1x128xf32>
    %234 = arith.maximumf %231, %233 : vector<1x128xf32>
    %c0_159 = arith.constant 0 : index
    %c17 = arith.constant 17 : index
    %c0_160 = arith.constant 0 : index
    %c0_161 = arith.constant 0 : index
    %235 = vector.load %arg4[%c0_159, %c17, %c0_160, %c0_161] : memref<1x25x1x128xf32, #tpu.memory_space<vmem>>, vector<1x1x1x128xf32>
    %236 = vector.shape_cast %235 : vector<1x1x1x128xf32> to vector<1x128xf32>
    %237 = arith.maximumf %234, %236 : vector<1x128xf32>
    %c0_162 = arith.constant 0 : index
    %c18 = arith.constant 18 : index
    %c0_163 = arith.constant 0 : index
    %c0_164 = arith.constant 0 : index
    %238 = vector.load %arg4[%c0_162, %c18, %c0_163, %c0_164] : memref<1x25x1x128xf32, #tpu.memory_space<vmem>>, vector<1x1x1x128xf32>
    %239 = vector.shape_cast %238 : vector<1x1x1x128xf32> to vector<1x128xf32>
    %240 = arith.maximumf %237, %239 : vector<1x128xf32>
    %c0_165 = arith.constant 0 : index
    %c19 = arith.constant 19 : index
    %c0_166 = arith.constant 0 : index
    %c0_167 = arith.constant 0 : index
    %241 = vector.load %arg4[%c0_165, %c19, %c0_166, %c0_167] : memref<1x25x1x128xf32, #tpu.memory_space<vmem>>, vector<1x1x1x128xf32>
    %242 = vector.shape_cast %241 : vector<1x1x1x128xf32> to vector<1x128xf32>
    %243 = arith.maximumf %240, %242 : vector<1x128xf32>
    %c0_168 = arith.constant 0 : index
    %c20 = arith.constant 20 : index
    %c0_169 = arith.constant 0 : index
    %c0_170 = arith.constant 0 : index
    %244 = vector.load %arg4[%c0_168, %c20, %c0_169, %c0_170] : memref<1x25x1x128xf32, #tpu.memory_space<vmem>>, vector<1x1x1x128xf32>
    %245 = vector.shape_cast %244 : vector<1x1x1x128xf32> to vector<1x128xf32>
    %246 = arith.maximumf %243, %245 : vector<1x128xf32>
    %c0_171 = arith.constant 0 : index
    %c21 = arith.constant 21 : index
    %c0_172 = arith.constant 0 : index
    %c0_173 = arith.constant 0 : index
    %247 = vector.load %arg4[%c0_171, %c21, %c0_172, %c0_173] : memref<1x25x1x128xf32, #tpu.memory_space<vmem>>, vector<1x1x1x128xf32>
    %248 = vector.shape_cast %247 : vector<1x1x1x128xf32> to vector<1x128xf32>
    %249 = arith.maximumf %246, %248 : vector<1x128xf32>
    %c0_174 = arith.constant 0 : index
    %c22 = arith.constant 22 : index
    %c0_175 = arith.constant 0 : index
    %c0_176 = arith.constant 0 : index
    %250 = vector.load %arg4[%c0_174, %c22, %c0_175, %c0_176] : memref<1x25x1x128xf32, #tpu.memory_space<vmem>>, vector<1x1x1x128xf32>
    %251 = vector.shape_cast %250 : vector<1x1x1x128xf32> to vector<1x128xf32>
    %252 = arith.maximumf %249, %251 : vector<1x128xf32>
    %c0_177 = arith.constant 0 : index
    %c23 = arith.constant 23 : index
    %c0_178 = arith.constant 0 : index
    %c0_179 = arith.constant 0 : index
    %253 = vector.load %arg4[%c0_177, %c23, %c0_178, %c0_179] : memref<1x25x1x128xf32, #tpu.memory_space<vmem>>, vector<1x1x1x128xf32>
    %254 = vector.shape_cast %253 : vector<1x1x1x128xf32> to vector<1x128xf32>
    %255 = arith.maximumf %252, %254 : vector<1x128xf32>
    %c0_180 = arith.constant 0 : index
    %c24 = arith.constant 24 : index
    %c0_181 = arith.constant 0 : index
    %c0_182 = arith.constant 0 : index
    %256 = vector.load %arg4[%c0_180, %c24, %c0_181, %c0_182] : memref<1x25x1x128xf32, #tpu.memory_space<vmem>>, vector<1x1x1x128xf32>
    %257 = vector.shape_cast %256 : vector<1x1x1x128xf32> to vector<1x128xf32>
    %258 = arith.maximumf %255, %257 : vector<1x128xf32>
    %cst_183 = arith.constant 0.000000e+00 : f32
    %259 = vector.broadcast %cst_183 : f32 to vector<1x128xf32>
    %cst_184 = arith.constant 0.000000e+00 : f32
    %260 = vector.broadcast %cst_184 : f32 to vector<1x128xf32>
    %c0_185 = arith.constant 0 : index
    %c5_186 = arith.constant 5 : index
    %c0_187 = arith.constant 0 : index
    %c0_188 = arith.constant 0 : index
    %261 = vector.load %arg4[%c0_185, %c5_186, %c0_187, %c0_188] : memref<1x25x1x128xf32, #tpu.memory_space<vmem>>, vector<1x1x1x128xf32>
    %262 = vector.shape_cast %261 : vector<1x1x1x128xf32> to vector<1x128xf32>
    %263 = arith.subf %262, %258 : vector<1x128xf32>
    %264 = math.exp %263 : vector<1x128xf32>
    %265 = arith.addf %259, %264 : vector<1x128xf32>
    %cst_189 = arith.constant 0.000000e+00 : f32
    %266 = vector.broadcast %cst_189 : f32 to vector<1x128xf32>
    %267 = arith.cmpf oeq, %199, %266 : vector<1x128xf32>
    %268 = arith.select %267, %262, %260 : vector<1x128xi1>, vector<1x128xf32>
    %c0_190 = arith.constant 0 : index
    %c6_191 = arith.constant 6 : index
    %c0_192 = arith.constant 0 : index
    %c0_193 = arith.constant 0 : index
    %269 = vector.load %arg4[%c0_190, %c6_191, %c0_192, %c0_193] : memref<1x25x1x128xf32, #tpu.memory_space<vmem>>, vector<1x1x1x128xf32>
    %270 = vector.shape_cast %269 : vector<1x1x1x128xf32> to vector<1x128xf32>
    %271 = arith.subf %270, %258 : vector<1x128xf32>
    %272 = math.exp %271 : vector<1x128xf32>
    %273 = arith.addf %265, %272 : vector<1x128xf32>
    %cst_194 = arith.constant 1.000000e+00 : f32
    %274 = vector.broadcast %cst_194 : f32 to vector<1x128xf32>
    %275 = arith.cmpf oeq, %199, %274 : vector<1x128xf32>
    %276 = arith.select %275, %270, %268 : vector<1x128xi1>, vector<1x128xf32>
    %c0_195 = arith.constant 0 : index
    %c7_196 = arith.constant 7 : index
    %c0_197 = arith.constant 0 : index
    %c0_198 = arith.constant 0 : index
    %277 = vector.load %arg4[%c0_195, %c7_196, %c0_197, %c0_198] : memref<1x25x1x128xf32, #tpu.memory_space<vmem>>, vector<1x1x1x128xf32>
    %278 = vector.shape_cast %277 : vector<1x1x1x128xf32> to vector<1x128xf32>
    %279 = arith.subf %278, %258 : vector<1x128xf32>
    %280 = math.exp %279 : vector<1x128xf32>
    %281 = arith.addf %273, %280 : vector<1x128xf32>
    %cst_199 = arith.constant 2.000000e+00 : f32
    %282 = vector.broadcast %cst_199 : f32 to vector<1x128xf32>
    %283 = arith.cmpf oeq, %199, %282 : vector<1x128xf32>
    %284 = arith.select %283, %278, %276 : vector<1x128xi1>, vector<1x128xf32>
    %c0_200 = arith.constant 0 : index
    %c8_201 = arith.constant 8 : index
    %c0_202 = arith.constant 0 : index
    %c0_203 = arith.constant 0 : index
    %285 = vector.load %arg4[%c0_200, %c8_201, %c0_202, %c0_203] : memref<1x25x1x128xf32, #tpu.memory_space<vmem>>, vector<1x1x1x128xf32>
    %286 = vector.shape_cast %285 : vector<1x1x1x128xf32> to vector<1x128xf32>
    %287 = arith.subf %286, %258 : vector<1x128xf32>
    %288 = math.exp %287 : vector<1x128xf32>
    %289 = arith.addf %281, %288 : vector<1x128xf32>
    %cst_204 = arith.constant 3.000000e+00 : f32
    %290 = vector.broadcast %cst_204 : f32 to vector<1x128xf32>
    %291 = arith.cmpf oeq, %199, %290 : vector<1x128xf32>
    %292 = arith.select %291, %286, %284 : vector<1x128xi1>, vector<1x128xf32>
    %c0_205 = arith.constant 0 : index
    %c9_206 = arith.constant 9 : index
    %c0_207 = arith.constant 0 : index
    %c0_208 = arith.constant 0 : index
    %293 = vector.load %arg4[%c0_205, %c9_206, %c0_207, %c0_208] : memref<1x25x1x128xf32, #tpu.memory_space<vmem>>, vector<1x1x1x128xf32>
    %294 = vector.shape_cast %293 : vector<1x1x1x128xf32> to vector<1x128xf32>
    %295 = arith.subf %294, %258 : vector<1x128xf32>
    %296 = math.exp %295 : vector<1x128xf32>
    %297 = arith.addf %289, %296 : vector<1x128xf32>
    %cst_209 = arith.constant 4.000000e+00 : f32
    %298 = vector.broadcast %cst_209 : f32 to vector<1x128xf32>
    %299 = arith.cmpf oeq, %199, %298 : vector<1x128xf32>
    %300 = arith.select %299, %294, %292 : vector<1x128xi1>, vector<1x128xf32>
    %c0_210 = arith.constant 0 : index
    %c10_211 = arith.constant 10 : index
    %c0_212 = arith.constant 0 : index
    %c0_213 = arith.constant 0 : index
    %301 = vector.load %arg4[%c0_210, %c10_211, %c0_212, %c0_213] : memref<1x25x1x128xf32, #tpu.memory_space<vmem>>, vector<1x1x1x128xf32>
    %302 = vector.shape_cast %301 : vector<1x1x1x128xf32> to vector<1x128xf32>
    %303 = arith.subf %302, %258 : vector<1x128xf32>
    %304 = math.exp %303 : vector<1x128xf32>
    %305 = arith.addf %297, %304 : vector<1x128xf32>
    %cst_214 = arith.constant 5.000000e+00 : f32
    %306 = vector.broadcast %cst_214 : f32 to vector<1x128xf32>
    %307 = arith.cmpf oeq, %199, %306 : vector<1x128xf32>
    %308 = arith.select %307, %302, %300 : vector<1x128xi1>, vector<1x128xf32>
    %c0_215 = arith.constant 0 : index
    %c11_216 = arith.constant 11 : index
    %c0_217 = arith.constant 0 : index
    %c0_218 = arith.constant 0 : index
    %309 = vector.load %arg4[%c0_215, %c11_216, %c0_217, %c0_218] : memref<1x25x1x128xf32, #tpu.memory_space<vmem>>, vector<1x1x1x128xf32>
    %310 = vector.shape_cast %309 : vector<1x1x1x128xf32> to vector<1x128xf32>
    %311 = arith.subf %310, %258 : vector<1x128xf32>
    %312 = math.exp %311 : vector<1x128xf32>
    %313 = arith.addf %305, %312 : vector<1x128xf32>
    %cst_219 = arith.constant 6.000000e+00 : f32
    %314 = vector.broadcast %cst_219 : f32 to vector<1x128xf32>
    %315 = arith.cmpf oeq, %199, %314 : vector<1x128xf32>
    %316 = arith.select %315, %310, %308 : vector<1x128xi1>, vector<1x128xf32>
    %c0_220 = arith.constant 0 : index
    %c12_221 = arith.constant 12 : index
    %c0_222 = arith.constant 0 : index
    %c0_223 = arith.constant 0 : index
    %317 = vector.load %arg4[%c0_220, %c12_221, %c0_222, %c0_223] : memref<1x25x1x128xf32, #tpu.memory_space<vmem>>, vector<1x1x1x128xf32>
    %318 = vector.shape_cast %317 : vector<1x1x1x128xf32> to vector<1x128xf32>
    %319 = arith.subf %318, %258 : vector<1x128xf32>
    %320 = math.exp %319 : vector<1x128xf32>
    %321 = arith.addf %313, %320 : vector<1x128xf32>
    %cst_224 = arith.constant 7.000000e+00 : f32
    %322 = vector.broadcast %cst_224 : f32 to vector<1x128xf32>
    %323 = arith.cmpf oeq, %199, %322 : vector<1x128xf32>
    %324 = arith.select %323, %318, %316 : vector<1x128xi1>, vector<1x128xf32>
    %c0_225 = arith.constant 0 : index
    %c13_226 = arith.constant 13 : index
    %c0_227 = arith.constant 0 : index
    %c0_228 = arith.constant 0 : index
    %325 = vector.load %arg4[%c0_225, %c13_226, %c0_227, %c0_228] : memref<1x25x1x128xf32, #tpu.memory_space<vmem>>, vector<1x1x1x128xf32>
    %326 = vector.shape_cast %325 : vector<1x1x1x128xf32> to vector<1x128xf32>
    %327 = arith.subf %326, %258 : vector<1x128xf32>
    %328 = math.exp %327 : vector<1x128xf32>
    %329 = arith.addf %321, %328 : vector<1x128xf32>
    %cst_229 = arith.constant 8.000000e+00 : f32
    %330 = vector.broadcast %cst_229 : f32 to vector<1x128xf32>
    %331 = arith.cmpf oeq, %199, %330 : vector<1x128xf32>
    %332 = arith.select %331, %326, %324 : vector<1x128xi1>, vector<1x128xf32>
    %c0_230 = arith.constant 0 : index
    %c14_231 = arith.constant 14 : index
    %c0_232 = arith.constant 0 : index
    %c0_233 = arith.constant 0 : index
    %333 = vector.load %arg4[%c0_230, %c14_231, %c0_232, %c0_233] : memref<1x25x1x128xf32, #tpu.memory_space<vmem>>, vector<1x1x1x128xf32>
    %334 = vector.shape_cast %333 : vector<1x1x1x128xf32> to vector<1x128xf32>
    %335 = arith.subf %334, %258 : vector<1x128xf32>
    %336 = math.exp %335 : vector<1x128xf32>
    %337 = arith.addf %329, %336 : vector<1x128xf32>
    %cst_234 = arith.constant 9.000000e+00 : f32
    %338 = vector.broadcast %cst_234 : f32 to vector<1x128xf32>
    %339 = arith.cmpf oeq, %199, %338 : vector<1x128xf32>
    %340 = arith.select %339, %334, %332 : vector<1x128xi1>, vector<1x128xf32>
    %c0_235 = arith.constant 0 : index
    %c15_236 = arith.constant 15 : index
    %c0_237 = arith.constant 0 : index
    %c0_238 = arith.constant 0 : index
    %341 = vector.load %arg4[%c0_235, %c15_236, %c0_237, %c0_238] : memref<1x25x1x128xf32, #tpu.memory_space<vmem>>, vector<1x1x1x128xf32>
    %342 = vector.shape_cast %341 : vector<1x1x1x128xf32> to vector<1x128xf32>
    %343 = arith.subf %342, %258 : vector<1x128xf32>
    %344 = math.exp %343 : vector<1x128xf32>
    %345 = arith.addf %337, %344 : vector<1x128xf32>
    %cst_239 = arith.constant 1.000000e+01 : f32
    %346 = vector.broadcast %cst_239 : f32 to vector<1x128xf32>
    %347 = arith.cmpf oeq, %199, %346 : vector<1x128xf32>
    %348 = arith.select %347, %342, %340 : vector<1x128xi1>, vector<1x128xf32>
    %c0_240 = arith.constant 0 : index
    %c16_241 = arith.constant 16 : index
    %c0_242 = arith.constant 0 : index
    %c0_243 = arith.constant 0 : index
    %349 = vector.load %arg4[%c0_240, %c16_241, %c0_242, %c0_243] : memref<1x25x1x128xf32, #tpu.memory_space<vmem>>, vector<1x1x1x128xf32>
    %350 = vector.shape_cast %349 : vector<1x1x1x128xf32> to vector<1x128xf32>
    %351 = arith.subf %350, %258 : vector<1x128xf32>
    %352 = math.exp %351 : vector<1x128xf32>
    %353 = arith.addf %345, %352 : vector<1x128xf32>
    %cst_244 = arith.constant 1.100000e+01 : f32
    %354 = vector.broadcast %cst_244 : f32 to vector<1x128xf32>
    %355 = arith.cmpf oeq, %199, %354 : vector<1x128xf32>
    %356 = arith.select %355, %350, %348 : vector<1x128xi1>, vector<1x128xf32>
    %c0_245 = arith.constant 0 : index
    %c17_246 = arith.constant 17 : index
    %c0_247 = arith.constant 0 : index
    %c0_248 = arith.constant 0 : index
    %357 = vector.load %arg4[%c0_245, %c17_246, %c0_247, %c0_248] : memref<1x25x1x128xf32, #tpu.memory_space<vmem>>, vector<1x1x1x128xf32>
    %358 = vector.shape_cast %357 : vector<1x1x1x128xf32> to vector<1x128xf32>
    %359 = arith.subf %358, %258 : vector<1x128xf32>
    %360 = math.exp %359 : vector<1x128xf32>
    %361 = arith.addf %353, %360 : vector<1x128xf32>
    %cst_249 = arith.constant 1.200000e+01 : f32
    %362 = vector.broadcast %cst_249 : f32 to vector<1x128xf32>
    %363 = arith.cmpf oeq, %199, %362 : vector<1x128xf32>
    %364 = arith.select %363, %358, %356 : vector<1x128xi1>, vector<1x128xf32>
    %c0_250 = arith.constant 0 : index
    %c18_251 = arith.constant 18 : index
    %c0_252 = arith.constant 0 : index
    %c0_253 = arith.constant 0 : index
    %365 = vector.load %arg4[%c0_250, %c18_251, %c0_252, %c0_253] : memref<1x25x1x128xf32, #tpu.memory_space<vmem>>, vector<1x1x1x128xf32>
    %366 = vector.shape_cast %365 : vector<1x1x1x128xf32> to vector<1x128xf32>
    %367 = arith.subf %366, %258 : vector<1x128xf32>
    %368 = math.exp %367 : vector<1x128xf32>
    %369 = arith.addf %361, %368 : vector<1x128xf32>
    %cst_254 = arith.constant 1.300000e+01 : f32
    %370 = vector.broadcast %cst_254 : f32 to vector<1x128xf32>
    %371 = arith.cmpf oeq, %199, %370 : vector<1x128xf32>
    %372 = arith.select %371, %366, %364 : vector<1x128xi1>, vector<1x128xf32>
    %c0_255 = arith.constant 0 : index
    %c19_256 = arith.constant 19 : index
    %c0_257 = arith.constant 0 : index
    %c0_258 = arith.constant 0 : index
    %373 = vector.load %arg4[%c0_255, %c19_256, %c0_257, %c0_258] : memref<1x25x1x128xf32, #tpu.memory_space<vmem>>, vector<1x1x1x128xf32>
    %374 = vector.shape_cast %373 : vector<1x1x1x128xf32> to vector<1x128xf32>
    %375 = arith.subf %374, %258 : vector<1x128xf32>
    %376 = math.exp %375 : vector<1x128xf32>
    %377 = arith.addf %369, %376 : vector<1x128xf32>
    %cst_259 = arith.constant 1.400000e+01 : f32
    %378 = vector.broadcast %cst_259 : f32 to vector<1x128xf32>
    %379 = arith.cmpf oeq, %199, %378 : vector<1x128xf32>
    %380 = arith.select %379, %374, %372 : vector<1x128xi1>, vector<1x128xf32>
    %c0_260 = arith.constant 0 : index
    %c20_261 = arith.constant 20 : index
    %c0_262 = arith.constant 0 : index
    %c0_263 = arith.constant 0 : index
    %381 = vector.load %arg4[%c0_260, %c20_261, %c0_262, %c0_263] : memref<1x25x1x128xf32, #tpu.memory_space<vmem>>, vector<1x1x1x128xf32>
    %382 = vector.shape_cast %381 : vector<1x1x1x128xf32> to vector<1x128xf32>
    %383 = arith.subf %382, %258 : vector<1x128xf32>
    %384 = math.exp %383 : vector<1x128xf32>
    %385 = arith.addf %377, %384 : vector<1x128xf32>
    %cst_264 = arith.constant 1.500000e+01 : f32
    %386 = vector.broadcast %cst_264 : f32 to vector<1x128xf32>
    %387 = arith.cmpf oeq, %199, %386 : vector<1x128xf32>
    %388 = arith.select %387, %382, %380 : vector<1x128xi1>, vector<1x128xf32>
    %c0_265 = arith.constant 0 : index
    %c21_266 = arith.constant 21 : index
    %c0_267 = arith.constant 0 : index
    %c0_268 = arith.constant 0 : index
    %389 = vector.load %arg4[%c0_265, %c21_266, %c0_267, %c0_268] : memref<1x25x1x128xf32, #tpu.memory_space<vmem>>, vector<1x1x1x128xf32>
    %390 = vector.shape_cast %389 : vector<1x1x1x128xf32> to vector<1x128xf32>
    %391 = arith.subf %390, %258 : vector<1x128xf32>
    %392 = math.exp %391 : vector<1x128xf32>
    %393 = arith.addf %385, %392 : vector<1x128xf32>
    %cst_269 = arith.constant 1.600000e+01 : f32
    %394 = vector.broadcast %cst_269 : f32 to vector<1x128xf32>
    %395 = arith.cmpf oeq, %199, %394 : vector<1x128xf32>
    %396 = arith.select %395, %390, %388 : vector<1x128xi1>, vector<1x128xf32>
    %c0_270 = arith.constant 0 : index
    %c22_271 = arith.constant 22 : index
    %c0_272 = arith.constant 0 : index
    %c0_273 = arith.constant 0 : index
    %397 = vector.load %arg4[%c0_270, %c22_271, %c0_272, %c0_273] : memref<1x25x1x128xf32, #tpu.memory_space<vmem>>, vector<1x1x1x128xf32>
    %398 = vector.shape_cast %397 : vector<1x1x1x128xf32> to vector<1x128xf32>
    %399 = arith.subf %398, %258 : vector<1x128xf32>
    %400 = math.exp %399 : vector<1x128xf32>
    %401 = arith.addf %393, %400 : vector<1x128xf32>
    %cst_274 = arith.constant 1.700000e+01 : f32
    %402 = vector.broadcast %cst_274 : f32 to vector<1x128xf32>
    %403 = arith.cmpf oeq, %199, %402 : vector<1x128xf32>
    %404 = arith.select %403, %398, %396 : vector<1x128xi1>, vector<1x128xf32>
    %c0_275 = arith.constant 0 : index
    %c23_276 = arith.constant 23 : index
    %c0_277 = arith.constant 0 : index
    %c0_278 = arith.constant 0 : index
    %405 = vector.load %arg4[%c0_275, %c23_276, %c0_277, %c0_278] : memref<1x25x1x128xf32, #tpu.memory_space<vmem>>, vector<1x1x1x128xf32>
    %406 = vector.shape_cast %405 : vector<1x1x1x128xf32> to vector<1x128xf32>
    %407 = arith.subf %406, %258 : vector<1x128xf32>
    %408 = math.exp %407 : vector<1x128xf32>
    %409 = arith.addf %401, %408 : vector<1x128xf32>
    %cst_279 = arith.constant 1.800000e+01 : f32
    %410 = vector.broadcast %cst_279 : f32 to vector<1x128xf32>
    %411 = arith.cmpf oeq, %199, %410 : vector<1x128xf32>
    %412 = arith.select %411, %406, %404 : vector<1x128xi1>, vector<1x128xf32>
    %c0_280 = arith.constant 0 : index
    %c24_281 = arith.constant 24 : index
    %c0_282 = arith.constant 0 : index
    %c0_283 = arith.constant 0 : index
    %413 = vector.load %arg4[%c0_280, %c24_281, %c0_282, %c0_283] : memref<1x25x1x128xf32, #tpu.memory_space<vmem>>, vector<1x1x1x128xf32>
    %414 = vector.shape_cast %413 : vector<1x1x1x128xf32> to vector<1x128xf32>
    %415 = arith.subf %414, %258 : vector<1x128xf32>
    %416 = math.exp %415 : vector<1x128xf32>
    %417 = arith.addf %409, %416 : vector<1x128xf32>
    %cst_284 = arith.constant 1.900000e+01 : f32
    %418 = vector.broadcast %cst_284 : f32 to vector<1x128xf32>
    %419 = arith.cmpf oeq, %199, %418 : vector<1x128xf32>
    %420 = arith.select %419, %414, %412 : vector<1x128xi1>, vector<1x128xf32>
    %421 = arith.subf %258, %420 : vector<1x128xf32>
    %422 = math.log %417 : vector<1x128xf32>
    %423 = arith.addf %421, %422 : vector<1x128xf32>
    %c0_285 = arith.constant 0 : index
    %c0_286 = arith.constant 0 : index
    %c5_287 = arith.constant 5 : index
    %c0_288 = arith.constant 0 : index
    %c0_289 = arith.constant 0 : index
    %424 = vector.load %arg6[%c0_285, %c0_286, %c5_287, %c0_288, %c0_289] : memref<1x1x6x1x128xf32, #tpu.memory_space<vmem>>, vector<1x1x1x1x128xf32>
    %425 = vector.shape_cast %424 : vector<1x1x1x1x128xf32> to vector<1x128xf32>
    %cst_290 = arith.constant 0.000000e+00 : f32
    %426 = vector.broadcast %cst_290 : f32 to vector<1x128xf32>
    %427 = arith.select %29, %423, %426 : vector<1x128xi1>, vector<1x128xf32>
    %428 = arith.addf %425, %427 : vector<1x128xf32>
    %c0_291 = arith.constant 0 : index
    %c0_292 = arith.constant 0 : index
    %c5_293 = arith.constant 5 : index
    %c0_294 = arith.constant 0 : index
    %c0_295 = arith.constant 0 : index
    %429 = vector.load %arg6[%c0_291, %c0_292, %c5_293, %c0_294, %c0_295] : memref<1x1x6x1x128xf32, #tpu.memory_space<vmem>>, vector<1x1x1x1x128xf32>
    %430 = vector.shape_cast %429 : vector<1x1x1x1x128xf32> to vector<1x128xf32>
    %431 = vector.shape_cast %428 : vector<1x128xf32> to vector<1x1x1x1x128xf32>
    tpu.vector_store %arg6[%c0_291, %c0_292, %c5_293, %c0_294, %c0_295], %431 {strides = array<i32>} : memref<1x1x6x1x128xf32, #tpu.memory_space<vmem>>, vector<1x1x1x1x128xf32>,
    return
  }
  func.func @transform_0(%arg0: i32, %arg1: i32, %arg2: i32, %arg3: memref<3x4xf32, #tpu.memory_space<smem>>) -> (i32, i32, i32, i32) {
    %c1_i32 = arith.constant 1 : i32
    %0 = arith.muli %arg0, %c1_i32 : i32
    %1 = arith.addi %0, %arg2 : i32
    %c0_i32 = arith.constant 0 : i32
    %c0_i32_0 = arith.constant 0 : i32
    %c0_i32_1 = arith.constant 0 : i32
    return %arg1, %c0_i32, %1, %c0_i32_0 : i32, i32, i32, i32
  }
  func.func @transform_1(%arg0: i32, %arg1: i32, %arg2: i32, %arg3: memref<3x4xf32, #tpu.memory_space<smem>>) -> (i32, i32, i32, i32) {
    %c1_i32 = arith.constant 1 : i32
    %0 = arith.muli %arg0, %c1_i32 : i32
    %1 = arith.addi %0, %arg2 : i32
    %c0_i32 = arith.constant 0 : i32
    %c0_i32_0 = arith.constant 0 : i32
    %c0_i32_1 = arith.constant 0 : i32
    return %arg1, %c0_i32, %1, %c0_i32_0 : i32, i32, i32, i32
  }
  func.func @transform_2(%arg0: i32, %arg1: i32, %arg2: i32, %arg3: memref<3x4xf32, #tpu.memory_space<smem>>) -> (i32, i32, i32, i32, i32) {
    %c0_i32 = arith.constant 0 : i32
    %c0_i32_0 = arith.constant 0 : i32
    %c0_i32_1 = arith.constant 0 : i32
    %c0_i32_2 = arith.constant 0 : i32
    return %arg0, %arg1, %c0_i32, %c0_i32_0, %c0_i32_1 : i32, i32, i32, i32, i32
  }
}

</mosaic_0001>

<llo_original>
// kernel: tpu_custom_call.1
$region0: #{tpu_custom_call.1}
  #allocation0 [shape = 'u32[]', space=smem, size = 0x4, offset = 0x4, fixed_abs, tag = 'smem constant byte address 0x4 - core index']
  #allocation1 [shape = 'u32[144,128]{1,0:T(1,128)}', space=vmem, size = 0x12000, scoped, tag = 'internal scratch']
  #allocation2 [shape = 's32[1]{0}', space=sflag, size = 0x4, scoped, tag = 'scoped memory for tpu_custom_call.1']
  #allocation3 [shape = 'u8[2048]{0}', space=smem, size = 0x800, scoped, tag = 'prefetched SMEM operand 0']
  %s0 = inlined_call_operand.hbm [shape: f32[3,4], index: 0, kind: input, shape index: {}]
  %s1 = inlined_call_operand.hbm [shape: f32[3,25,1,128], index: 1, kind: input, shape index: {}]
  %s2 = inlined_call_operand.hbm [shape: f32[3,6,1,128], index: 2, kind: input, shape index: {}]
  %s3 = inlined_call_operand.hbm [shape: f32[1,3,6,1,128], index: 3, kind: output, shape index: {}]
  %s4 = sld [smem:[#allocation0]]
  $region53: #{tpu_custom_call.1} parent=0
    _
  %s6 = ssub.s32 1, %s4
  %s7 = scalar_select 0, %s6, %s4
  %9 = dma.hbm_to_smem %s0, 64, [#allocation3], [#allocation2]
  %10 = dma.done [#allocation2], 64
  %11 = sfence
  $region1: #{tpu_custom_call.1} parent=0
    #allocation4 [shape = 'u8[25600]{0}', space=vmem, size = 0x6400, scoped, tag = 'input window, operand 1']
    #allocation5 [shape = 's32[2]{0}', space=sflag, size = 0x8, scoped, tag = 'scoped memory for tpu_custom_call.1']
    #allocation6 [shape = 's32[2]{0}', space=sflag, size = 0x8, scoped, tag = 'scoped memory for tpu_custom_call.1']
    #allocation7 [shape = 'u8[6144]{0}', space=vmem, size = 0x1800, scoped, tag = 'input window, operand 2']
    #allocation8 [shape = 's32[2]{0}', space=sflag, size = 0x8, scoped, tag = 'scoped memory for tpu_custom_call.1']
    #allocation9 [shape = 'u8[6144]{0}', space=vmem, size = 0x1800, scoped, tag = 'output window, operand 0']
    %12 = vsyncpa [#allocation5], 0
    %s13 = scalar_lea.sflag [#allocation5], 1
    %14 = vsyncpa %s13, 0
    %15 = vsyncpa [#allocation8], 0
    %s16 = scalar_lea.sflag [#allocation8], 1
    %17 = vsyncpa %s16, 0
    %18 = vsyncpa [#allocation6], 0
    %s19 = scalar_lea.sflag [#allocation6], 1
    %20 = vsyncpa %s19, 0
    loop: start=0, step=1, limit=5
    $region2: #{tpu_custom_call.1} parent=1 // loop_pre_header
      _
    $region3: #{tpu_custom_call.1} parent=1 // loop_header
      %s22 = sphi 0, %s26
      %p23 = scmp.ge.s32.totalorder %s22, 5
      %s29 = sphi 0, %s48
      %s30 = sphi 0, %s44
      %s31 = sphi 0, %s40
      %s32 = sphi 0, %s29
      %s33 = sphi 0, %s30
      %s34 = sphi 0, %s31
      %s35 = sphi 0, %s32
      %s36 = sphi 0, %s33
      %s37 = sphi 0, %s34
      %s55 = sphi 0, %s57
      %s58 = sphi 0, %s55
      %s59 = sphi 0, %s58
      %s75 = sphi 0, %s59
      %s85 = sphi 0, %s87
      %s88 = sphi 0, %s85
      %s89 = sphi 0, %s88
      %s105 = sphi 0, %s89
      %s113 = sphi 0, %s115
      %s116 = sphi 0, %s113
      %s117 = sphi 0, %s116
      %s133 = sphi 0, %s117
    $region4: #{tpu_custom_call.1} parent=1 // loop_header_branch
      %25 = sbr.rel (%p23) target = $region8
    $region5: #{tpu_custom_call.1} parent=1 // loop_body
      %s27 = ssub.s32 %s22, 1
      %s28 = ssub.s32 %s22, 2
      %s38 = sadd.s32 1, %s31
      %p39 = scmp.ge.s32.totalorder %s38, 1
      %s40 = scalar_select %p39, 0, %s38
      %s41 = sadd.s32 1, %s30
      %s42 = scalar_select %p39, %s41, %s30
      %p43 = scmp.ge.s32.totalorder %s42, 3
      %s44 = scalar_select %p43, 0, %s42
      %s45 = sadd.s32 1, %s29
      %s46 = scalar_select %p43, %s45, %s29
      %p47 = scmp.ge.s32.totalorder %s46, 1
      %s48 = scalar_select %p47, 0, %s46
      %s49 = sadd.s32 %s29, %s31
      %s50 = sadd.s32 %s48, %s40
      %s51 = ssub.s32 %s30, %s44
      %s52 = ssub.s32 %s49, %s50
      %s53 = sor.u32 %s51, %s52
      %p54 = scmp.eq.s32.totalorder %s53, 0
      %s56 = sadd.s32 %s55, 1
      %s57 = scalar_select %p54, %s55, %s56
      %p60 = pneg %p54
      %p61 = scmp.eq.s32.totalorder %s22, 2
      %p62 = por %p60, %p61
      %p63 = scmp.ne.s32.totalorder %s55, %s58
      %p64 = scmp.eq.s32.totalorder %s22, 0
      %p65 = por %p63, %p64
      %p66 = scmp.ne.s32.totalorder %s55, %s58
      %p67 = scmp.eq.s32.totalorder %s27, 2
      %p68 = por %p66, %p67
      %p69 = scmp.ne.s32.totalorder %s58, %s59
      %p70 = scmp.eq.s32.totalorder %s27, 0
      %p71 = por %p69, %p70
      %p72 = scmp.ne.s32.totalorder %s58, %s59
      %p73 = scmp.eq.s32.totalorder %s28, 2
      %p74 = por %p72, %p73
      %p76 = scmp.ne.s32.totalorder %s59, %s75
      %p77 = scmp.eq.s32.totalorder %s28, 0
      %p78 = por %p76, %p77
      %s79 = sadd.s32 %s29, %s31
      %s80 = sadd.s32 %s48, %s40
      %s81 = ssub.s32 %s30, %s44
      %s82 = ssub.s32 %s79, %s80
      %s83 = sor.u32 %s81, %s82
      %p84 = scmp.eq.s32.totalorder %s83, 0
      %s86 = sadd.s32 %s85, 1
      %s87 = scalar_select %p84, %s85, %s86
      %p90 = pneg %p84
      %p91 = scmp.eq.s32.totalorder %s22, 2
      %p92 = por %p90, %p91
      %p93 = scmp.ne.s32.totalorder %s85, %s88
      %p94 = scmp.eq.s32.totalorder %s22, 0
      %p95 = por %p93, %p94
      %p96 = scmp.ne.s32.totalorder %s85, %s88
      %p97 = scmp.eq.s32.totalorder %s27, 2
      %p98 = por %p96, %p97
      %p99 = scmp.ne.s32.totalorder %s88, %s89
      %p100 = scmp.eq.s32.totalorder %s27, 0
      %p101 = por %p99, %p100
      %p102 = scmp.ne.s32.totalorder %s88, %s89
      %p103 = scmp.eq.s32.totalorder %s28, 2
      %p104 = por %p102, %p103
      %p106 = scmp.ne.s32.totalorder %s89, %s105
      %p107 = scmp.eq.s32.totalorder %s28, 0
      %p108 = por %p106, %p107
      %s109 = ssub.s32 %s29, %s48
      %s110 = ssub.s32 %s30, %s44
      %s111 = sor.u32 %s109, %s110
      %p112 = scmp.eq.s32.totalorder %s111, 0
      %s114 = sadd.s32 %s113, 1
      %s115 = scalar_select %p112, %s113, %s114
      %p118 = pneg %p112
      %p119 = scmp.eq.s32.totalorder %s22, 2
      %p120 = por %p118, %p119
      %p121 = scmp.ne.s32.totalorder %s113, %s116
      %p122 = scmp.eq.s32.totalorder %s22, 0
      %p123 = por %p121, %p122
      %p124 = scmp.ne.s32.totalorder %s113, %s116
      %p125 = scmp.eq.s32.totalorder %s27, 2
      %p126 = por %p124, %p125
      %p127 = scmp.ne.s32.totalorder %s116, %s117
      %p128 = scmp.eq.s32.totalorder %s27, 0
      %p129 = por %p127, %p128
      %p130 = scmp.ne.s32.totalorder %s116, %s117
      %p131 = scmp.eq.s32.totalorder %s28, 2
      %p132 = por %p130, %p131
      %p134 = scmp.ne.s32.totalorder %s117, %s133
      %p135 = scmp.eq.s32.totalorder %s28, 0
      %p136 = por %p134, %p135
      %p137 = scmp.le.s32.totalorder 1, %s22
      %p138 = scmp.lt.s32.totalorder %s22, 4
      %p139 = pnand %p137, %p138
      %p140 = pneg %p139
      // Predicated region
      $region9: #{tpu_custom_call.1} parent=5 // pred_check
        _
      $region10: #{tpu_custom_call.1} parent=5 // pred_check_branch
        %142 = sbr.rel (%p139) target = $region12
      $region11: #{tpu_custom_call.1} parent=5 // pred_region
        %s143 = ssub.s32 %s22, 1
      $region12: #{tpu_custom_call.1} parent=5 // pred_fallthru
        _
      %p144 = scmp.lt.s32.totalorder %s22, 3
      // Predicated region
      $region13: #{tpu_custom_call.1} parent=5 // pred_check
        %p145 = pneg %p144
      $region14: #{tpu_custom_call.1} parent=5 // pred_check_branch
        %147 = sbr.rel (%p145) target = $region16
      $region15: #{tpu_custom_call.1} parent=5 // pred_region
        // Predicated region
        $region17: #{tpu_custom_call.1} parent=15 // pred_check
          %p148 = pneg %p65
        $region18: #{tpu_custom_call.1} parent=15 // pred_check_branch
          %150 = sbr.rel (%p148) target = $region20
        $region19: #{tpu_custom_call.1} parent=15 // pred_region
          %s151 = sand.u32 %s55, 1
          %s152 = scalar_lea.sflag [#allocation5], %s151
          %s153 = sand.u32 %s55, 1
          %s154 = smul.addr %s153, 25
          %s155 = scalar_lea.vmem [#allocation4], %s154
          %s156 = sadd.s32 %s29, %s31
          %s158 = ssub.s32 400, 400
          %159 = vsyncadd %s152, %s158
          %s160 = smul.addr %s30, 25
          %s161 = sadd.s32 %s156, %s160
          %s162 = smul.addr %s161, 16
          %s163 = scalar_lea.hbm %s1, %s162
          %s164 = sshll.u32 %s155, 4
          %s165 = int_to_ptr.vmem [resolvable:$true] %s164
          %170 = dma.hbm_to_vmem [thread:$0]  %s163, 400, %s165, %s152, 16, 16, 1
        $region20: #{tpu_custom_call.1} parent=15 // pred_fallthru
          _
        // Predicated region
        $region21: #{tpu_custom_call.1} parent=15 // pred_check
          %p171 = pneg %p95
        $region22: #{tpu_custom_call.1} parent=15 // pred_check_branch
          %173 = sbr.rel (%p171) target = $region24
        $region23: #{tpu_custom_call.1} parent=15 // pred_region
          %s174 = sand.u32 %s85, 1
          %s175 = scalar_lea.sflag [#allocation8], %s174
          %s176 = sand.u32 %s85, 1
          %s177 = smul.addr %s176, 6
          %s178 = scalar_lea.vmem [#allocation7], %s177
          %s179 = sadd.s32 %s29, %s31
          %s181 = ssub.s32 96, 96
          %182 = vsyncadd %s175, %s181
          %s183 = smul.addr %s30, 6
          %s184 = sadd.s32 %s179, %s183
          %s185 = smul.addr %s184, 16
          %s186 = scalar_lea.hbm %s2, %s185
          %s187 = sshll.u32 %s178, 4
          %s188 = int_to_ptr.vmem [resolvable:$true] %s187
          %193 = dma.hbm_to_vmem [thread:$0]  %s186, 96, %s188, %s175, 16, 16, 1
        $region24: #{tpu_custom_call.1} parent=15 // pred_fallthru
          _
      $region16: #{tpu_custom_call.1} parent=5 // pred_fallthru
        _
      %p194 = scmp.le.s32.totalorder 1, %s22
      %p195 = scmp.lt.s32.totalorder %s22, 4
      %p196 = pnand %p194, %p195
      %p197 = pneg %p196
      // Predicated region
      $region25: #{tpu_custom_call.1} parent=5 // pred_check
        _
      $region26: #{tpu_custom_call.1} parent=5 // pred_check_branch
        %199 = sbr.rel (%p196) target = $region28
      $region27: #{tpu_custom_call.1} parent=5 // pred_region
        %s200 = ssub.s32 %s22, 1
        %s201 = sand.u32 %s58, 1
        %s202 = scalar_lea.sflag [#allocation5], %s201
        %s203 = sand.u32 %s58, 1
        %s204 = smul.addr %s203, 25
        %s205 = scalar_lea.vmem [#allocation4], %s204
        // Predicated region
        $region29: #{tpu_custom_call.1} parent=27 // pred_check
          %p206 = pneg %p71
        $region30: #{tpu_custom_call.1} parent=27 // pred_check_branch
          %208 = sbr.rel (%p206) target = $region32
        $region31: #{tpu_custom_call.1} parent=27 // pred_region
          %209 = dma.done %s202, 400
        $region32: #{tpu_custom_call.1} parent=27 // pred_fallthru
          _
        %s210 = sand.u32 %s88, 1
        %s211 = scalar_lea.sflag [#allocation8], %s210
        %s212 = sand.u32 %s88, 1
        %s213 = smul.addr %s212, 6
        %s214 = scalar_lea.vmem [#allocation7], %s213
        // Predicated region
        $region33: #{tpu_custom_call.1} parent=27 // pred_check
          %p215 = pneg %p101
        $region34: #{tpu_custom_call.1} parent=27 // pred_check_branch
          %217 = sbr.rel (%p215) target = $region36
        $region35: #{tpu_custom_call.1} parent=27 // pred_region
          %218 = dma.done %s211, 96
        $region36: #{tpu_custom_call.1} parent=27 // pred_fallthru
          _
        %s219 = sand.u32 %s58, 1
        %s220 = scalar_lea.sflag [#allocation5], %s219
        %s221 = sand.u32 %s58, 1
        %s222 = smul.addr %s221, 25
        %s223 = scalar_lea.vmem [#allocation4], %s222
        %p224 = pneg %p71
        %p225 = pneg %p68
        %s226 = sand.u32 %s88, 1
        %s227 = scalar_lea.sflag [#allocation8], %s226
        %s228 = sand.u32 %s88, 1
        %s229 = smul.addr %s228, 6
        %s230 = scalar_lea.vmem [#allocation7], %s229
        %p231 = pneg %p101
        %p232 = pneg %p98
        %p233 = pneg %p129
        %p234 = pneg %p126
        %s235 = sand.u32 %s116, 1
        %s236 = scalar_lea.sflag [#allocation6], %s235
        %s237 = sand.u32 %s116, 1
        %s238 = smul.addr %s237, 6
        %s239 = scalar_lea.vmem [#allocation9], %s238
        %s240 = sadd.s32 %s32, %s34
        %s241 = sadd.s32 %s32, %s34
        %p242 = scmp.eq.s32.totalorder %s34, 0
        // Predicated region
        $region37: #{tpu_custom_call.1} parent=27 // pred_check
          %p243 = pneg %p242
        $region38: #{tpu_custom_call.1} parent=27 // pred_check_branch
          %245 = sbr.rel (%p243) target = $region40
        $region39: #{tpu_custom_call.1} parent=27 // pred_region
          %246 = vst [vmem:[%s239] sm:$0x1] 0.0
          %247 = vst [vmem:[%s239 + $0x1] sm:$0x1] 0.0
          %248 = vst [vmem:[%s239 + $0x2] sm:$0x1] 0.0
          %249 = vst [vmem:[%s239 + $0x3] sm:$0x1] 0.0
          %250 = vst [vmem:[%s239 + $0x4] sm:$0x1] 0.0
          %251 = vst [vmem:[%s239 + $0x5] sm:$0x1] 0.0
        $region40: #{tpu_custom_call.1} parent=27 // pred_fallthru
          _
        %v252 = vlaneseq
        %v253 = vshrl.u32 %v252, 7
        %v254 = vlaneseq
        %v255 = vand.u32 %v254, 127
        %s256 = sadd.s32 %s32, %s34
        %s257 = smul.u32 %s256, 128
        %v258 = vmul.u32 %v253, 128
        %v259 = vstv %s257
        %v260 = vadd.s32 %v259, %v258
        %v261 = vadd.s32 %v260, %v255
        %vm262 = vcmp.lt.s32.totalorder %v261, 128
        %s263 = smul.u32 %s33, 128
        %s264 = sld [smem:[#allocation3 + %s263]]
        %s265 = sadd.s32 %s263, 1
        %s266 = sld [smem:[#allocation3 + %s265]]
        %s267 = sadd.s32 %s263, 2
        %s268 = sld [smem:[#allocation3 + %s267]]
        %s269 = sadd.s32 %s263, 3
        %s270 = sld [smem:[#allocation3 + %s269]]
        %v271 = vld [vmem:[%s214] sm:$0x1]
        %v272 = vld [vmem:[%s205] sm:$0x1]
        %vm273 = vcmp.eq.f32.partialorder %v271, 1.0
        %vm274 = vmand %vm262, %vm273
        %vm275 = vcmp.eq.f32.partialorder %v271, 0.0
        %vm276 = vmand %vm262, %vm275
        %v277 = vmax.f32 %v272, 0.0
        %v278 = vmul.f32 %v272, %v271
        %v279 = vsub.f32 %v277, %v278
        %v280 = vand.u32 2147483647, %v272
        %v281 = vsub.f32 0.0, %v280
        %v282 = vmul.f32 %v281, 1.442695
        %v283 = vpow.pop %v282
        %v284 = vadd.f32 %v283, 1.0
        %v285 = vlog2.pop %v284
        %v286 = vmul.f32 %v285, 0.6931472
        %v287 = vmul.f32 -0.5, %v283
        %v288 = vadd.f32 %v287, 1.0
        %v289 = vmul.f32 %v288, %v283
        %v290 = vand.u32 2147483647, %v283
        %vm291 = vcmp.lt.f32.partialorder %v290, 0.0004427343
        %v292 = vsel %vm291, %v289, %v286
        %v293 = vadd.f32 %v279, %v292
        %v294 = vld [vmem:[%s239] sm:$0x1]
        %v295 = vsel %vm276, %v293, 0.0
        %v296 = vadd.f32 %v294, %v295
        %297 = vst [vmem:[%s239] sm:$0x1] %v296
        %s298 = scalar_lea.vmem %s239, 1 [#allocation9]
        %v299 = vld [vmem:[%s298] sm:$0x1]
        %v300 = vsel %vm276, 1.0, 0.0
        %v301 = vadd.f32 %v299, %v300
        %302 = vst [vmem:[%s298] sm:$0x1] %v301
        %s303 = scalar_lea.vmem %s239, 3 [#allocation9]
        %v304 = vld [vmem:[%s303] sm:$0x1]
        %v305 = vsel %vm274, 1.0, 0.0
        %v306 = vadd.f32 %v304, %v305
        %307 = vst [vmem:[%s303] sm:$0x1] %v306
        %s308 = scalar_lea.vmem %s205, 1 [#allocation4]
        %v309 = vld [vmem:[%s308] sm:$0x1]
        %v310 = vxor.u32 %v309, 2147483648
        %v311 = vmul.f32 %v310, 1.442695
        %v312 = vpow.pop %v311
        %v313 = vadd.f32 %v312, 1.0
        %v314 = vrcp.pop %v313
        %v315 = vmul.f32 1.0, %v314
        %s316 = scalar_lea.vmem %s205, 2 [#allocation4]
        %v317 = vld [vmem:[%s316] sm:$0x1]
        %v318 = vxor.u32 %v317, 2147483648
        %v319 = vmul.f32 %v318, 1.442695
        %v320 = vpow.pop %v319
        %v321 = vadd.f32 %v320, 1.0
        %v322 = vrcp.pop %v321
        %v323 = vmul.f32 1.0, %v322
        %s324 = scalar_lea.vmem %s205, 3 [#allocation4]
        %v325 = vld [vmem:[%s324] sm:$0x1]
        %s326 = scalar_lea.vmem %s205, 4 [#allocation4]
        %v327 = vld [vmem:[%s326] sm:$0x1]
        %v328 = vmul.f32 %v325, 1.442695
        %v329 = vpow.pop %v328
        %v330 = vstv %s264
        %v331 = vmul.f32 %v329, %v330
        %v332 = vmul.f32 %v327, 1.442695
        %v333 = vpow.pop %v332
        %v334 = vstv %s266
        %v335 = vmul.f32 %v333, %v334
        %s336 = scalar_lea.vmem %s214, 1 [#allocation7]
        %v337 = vld [vmem:[%s336] sm:$0x1]
        %s338 = scalar_lea.vmem %s214, 2 [#allocation7]
        %v339 = vld [vmem:[%s338] sm:$0x1]
        %s340 = scalar_lea.vmem %s214, 3 [#allocation7]
        %v341 = vld [vmem:[%s340] sm:$0x1]
        %s342 = scalar_lea.vmem %s214, 4 [#allocation7]
        %v343 = vld [vmem:[%s342] sm:$0x1]
        %v344 = vmul.f32 %v331, 0.5
        %v345 = vsub.f32 %v315, %v344
        %v346 = vadd.f32 %v315, %v344
        %v347 = vmul.f32 %v335, 0.5
        %v348 = vsub.f32 %v323, %v347
        %v349 = vadd.f32 %v323, %v347
        %v350 = vmul.f32 %v341, 0.5
        %v351 = vsub.f32 %v337, %v350
        %v352 = vadd.f32 %v337, %v350
        %v353 = vmul.f32 %v343, 0.5
        %v354 = vsub.f32 %v339, %v353
        %v355 = vadd.f32 %v339, %v353
        %v356 = vmin.f32 %v346, %v352
        %v357 = vmax.f32 %v345, %v351
        %v358 = vsub.f32 %v356, %v357
        %v359 = vmax.f32 %v358, 0.0
        %v360 = vmin.f32 %v349, %v355
        %v361 = vmax.f32 %v348, %v354
        %v362 = vsub.f32 %v360, %v361
        %v363 = vmax.f32 %v362, 0.0
        %v364 = vmul.f32 %v359, %v363
        %v365 = vsub.f32 %v346, %v345
        %v366 = vsub.f32 %v349, %v348
        %v367 = vmul.f32 %v365, %v366
        %v368 = vand.u32 2147483647, %v367
        %v369 = vsub.f32 %v352, %v351
        %v370 = vsub.f32 %v355, %v354
        %v371 = vmul.f32 %v369, %v370
        %v372 = vand.u32 2147483647, %v371
        %v373 = vadd.f32 %v368, %v372
        %v374 = vsub.f32 %v373, %v364
        %v375 = vadd.f32 %v374, 1e-06
        %v376 = vrcp.pop %v375
        %v377 = vmul.f32 %v364, %v376
        %v378 = vmul.f32 %v377, %v271
        %v379 = vmul.f32 %v272, %v378
        %v380 = vsub.f32 %v277, %v379
        %v381 = vadd.f32 %v380, %v292
        %s382 = scalar_lea.vmem %s239, 2 [#allocation9]
        %v383 = vld [vmem:[%s382] sm:$0x1]
        %v384 = vsel %vm274, %v381, 0.0
        %v385 = vadd.f32 %v383, %v384
        %386 = vst [vmem:[%s382] sm:$0x1] %v385
        %v387 = vstv %s268
        %v388 = vmul.f32 %v341, %v387
        %v389 = vadd.f32 %v388, 1e-16
        %v390 = vlog2.pop %v389
        %v391 = vmul.f32 %v390, 0.6931472
        %v392 = vstv %s270
        %v393 = vmul.f32 %v343, %v392
        %v394 = vadd.f32 %v393, 1e-16
        %v395 = vlog2.pop %v394
        %v396 = vmul.f32 %v395, 0.6931472
        %v397 = vsub.f32 %v315, %v337
        %v398 = vmul.f32 %v397, %v397
        %v399 = vsub.f32 %v323, %v339
        %v400 = vmul.f32 %v399, %v399
        %v401 = vadd.f32 %v398, %v400
        %v402 = vsub.f32 %v325, %v391
        %v403 = vmul.f32 %v402, %v402
        %v404 = vadd.f32 %v401, %v403
        %v405 = vsub.f32 %v327, %v396
        %v406 = vmul.f32 %v405, %v405
        %v407 = vadd.f32 %v404, %v406
        %s408 = scalar_lea.vmem %s239, 4 [#allocation9]
        %v409 = vld [vmem:[%s408] sm:$0x1]
        %v410 = vsel %vm274, %v407, 0.0
        %v411 = vadd.f32 %v409, %v410
        %412 = vst [vmem:[%s408] sm:$0x1] %v411
        %s413 = scalar_lea.vmem %s214, 5 [#allocation7]
        %v414 = vld [vmem:[%s413] sm:$0x1]
        %s415 = scalar_lea.vmem %s205, 5 [#allocation4]
        %v416 = vld [vmem:[%s415] sm:$0x1]
        %s417 = scalar_lea.vmem %s205, 6 [#allocation4]
        %v418 = vld [vmem:[%s417] sm:$0x1]
        %v419 = vmax.f32 %v416, %v418
        %s420 = scalar_lea.vmem %s205, 7 [#allocation4]
        %v421 = vld [vmem:[%s420] sm:$0x1]
        %v422 = vmax.f32 %v419, %v421
        %s423 = scalar_lea.vmem %s205, 8 [#allocation4]
        %v424 = vld [vmem:[%s423] sm:$0x1]
        %v425 = vmax.f32 %v422, %v424
        %s426 = scalar_lea.vmem %s205, 9 [#allocation4]
        %v427 = vld [vmem:[%s426] sm:$0x1]
        %v428 = vmax.f32 %v425, %v427
        %s429 = scalar_lea.vmem %s205, 10 [#allocation4]
        %v430 = vld [vmem:[%s429] sm:$0x1]
        %v431 = vmax.f32 %v428, %v430
        %s432 = scalar_lea.vmem %s205, 11 [#allocation4]
        %v433 = vld [vmem:[%s432] sm:$0x1]
        %v434 = vmax.f32 %v431, %v433
        %s435 = scalar_lea.vmem %s205, 12 [#allocation4]
        %v436 = vld [vmem:[%s435] sm:$0x1]
        %v437 = vmax.f32 %v434, %v436
        %s438 = scalar_lea.vmem %s205, 13 [#allocation4]
        %v439 = vld [vmem:[%s438] sm:$0x1]
        %v440 = vmax.f32 %v437, %v439
        %s441 = scalar_lea.vmem %s205, 14 [#allocation4]
        %v442 = vld [vmem:[%s441] sm:$0x1]
        %v443 = vmax.f32 %v440, %v442
        %s444 = scalar_lea.vmem %s205, 15 [#allocation4]
        %v445 = vld [vmem:[%s444] sm:$0x1]
        %v446 = vmax.f32 %v443, %v445
        %s447 = scalar_lea.vmem %s205, 16 [#allocation4]
        %v448 = vld [vmem:[%s447] sm:$0x1]
        %v449 = vmax.f32 %v446, %v448
        %s450 = scalar_lea.vmem %s205, 17 [#allocation4]
        %v451 = vld [vmem:[%s450] sm:$0x1]
        %v452 = vmax.f32 %v449, %v451
        %s453 = scalar_lea.vmem %s205, 18 [#allocation4]
        %v454 = vld [vmem:[%s453] sm:$0x1]
        %v455 = vmax.f32 %v452, %v454
        %s456 = scalar_lea.vmem %s205, 19 [#allocation4]
        %v457 = vld [vmem:[%s456] sm:$0x1]
        %v458 = vmax.f32 %v455, %v457
        %s459 = scalar_lea.vmem %s205, 20 [#allocation4]
        %v460 = vld [vmem:[%s459] sm:$0x1]
        %v461 = vmax.f32 %v458, %v460
        %s462 = scalar_lea.vmem %s205, 21 [#allocation4]
        %v463 = vld [vmem:[%s462] sm:$0x1]
        %v464 = vmax.f32 %v461, %v463
        %s465 = scalar_lea.vmem %s205, 22 [#allocation4]
        %v466 = vld [vmem:[%s465] sm:$0x1]
        %v467 = vmax.f32 %v464, %v466
        %s468 = scalar_lea.vmem %s205, 23 [#allocation4]
        %v469 = vld [vmem:[%s468] sm:$0x1]
        %v470 = vmax.f32 %v467, %v469
        %s471 = scalar_lea.vmem %s205, 24 [#allocation4]
        %v472 = vld [vmem:[%s471] sm:$0x1]
        %v473 = vmax.f32 %v470, %v472
        %v474 = vsub.f32 %v416, %v473
        %v475 = vmul.f32 %v474, 1.442695
        %v476 = vpow.pop %v475
        %v477 = vadd.f32 %v476, 0.0
        %vm478 = vcmp.eq.f32.partialorder %v414, 0.0
        %v479 = vsel %vm478, %v416, 0.0
        %v480 = vsub.f32 %v418, %v473
        %v481 = vmul.f32 %v480, 1.442695
        %v482 = vpow.pop %v481
        %v483 = vadd.f32 %v477, %v482
        %vm484 = vcmp.eq.f32.partialorder %v414, 1.0
        %v485 = vsel %vm484, %v418, %v479
        %v486 = vsub.f32 %v421, %v473
        %v487 = vmul.f32 %v486, 1.442695
        %v488 = vpow.pop %v487
        %v489 = vadd.f32 %v483, %v488
        %vm490 = vcmp.eq.f32.partialorder %v414, 2.0
        %v491 = vsel %vm490, %v421, %v485
        %v492 = vsub.f32 %v424, %v473
        %v493 = vmul.f32 %v492, 1.442695
        %v494 = vpow.pop %v493
        %v495 = vadd.f32 %v489, %v494
        %vm496 = vcmp.eq.f32.partialorder %v414, 3.0
        %v497 = vsel %vm496, %v424, %v491
        %v498 = vsub.f32 %v427, %v473
        %v499 = vmul.f32 %v498, 1.442695
        %v500 = vpow.pop %v499
        %v501 = vadd.f32 %v495, %v500
        %vm502 = vcmp.eq.f32.partialorder %v414, 4.0
        %v503 = vsel %vm502, %v427, %v497
        %v504 = vsub.f32 %v430, %v473
        %v505 = vmul.f32 %v504, 1.442695
        %v506 = vpow.pop %v505
        %v507 = vadd.f32 %v501, %v506
        %vm508 = vcmp.eq.f32.partialorder %v414, 5.0
        %v509 = vsel %vm508, %v430, %v503
        %v510 = vsub.f32 %v433, %v473
        %v511 = vmul.f32 %v510, 1.442695
        %v512 = vpow.pop %v511
        %v513 = vadd.f32 %v507, %v512
        %vm514 = vcmp.eq.f32.partialorder %v414, 6.0
        %v515 = vsel %vm514, %v433, %v509
        %v516 = vsub.f32 %v436, %v473
        %v517 = vmul.f32 %v516, 1.442695
        %v518 = vpow.pop %v517
        %v519 = vadd.f32 %v513, %v518
        %vm520 = vcmp.eq.f32.partialorder %v414, 7.0
        %v521 = vsel %vm520, %v436, %v515
        %v522 = vsub.f32 %v439, %v473
        %v523 = vmul.f32 %v522, 1.442695
        %v524 = vpow.pop %v523
        %v525 = vadd.f32 %v519, %v524
        %vm526 = vcmp.eq.f32.partialorder %v414, 8.0
        %v527 = vsel %vm526, %v439, %v521
        %v528 = vsub.f32 %v442, %v473
        %v529 = vmul.f32 %v528, 1.442695
        %v530 = vpow.pop %v529
        %v531 = vadd.f32 %v525, %v530
        %vm532 = vcmp.eq.f32.partialorder %v414, 9.0
        %v533 = vsel %vm532, %v442, %v527
        %v534 = vsub.f32 %v445, %v473
        %v535 = vmul.f32 %v534, 1.442695
        %v536 = vpow.pop %v535
        %v537 = vadd.f32 %v531, %v536
        %vm538 = vcmp.eq.f32.partialorder %v414, 10.0
        %v539 = vsel %vm538, %v445, %v533
        %v540 = vsub.f32 %v448, %v473
        %v541 = vmul.f32 %v540, 1.442695
        %v542 = vpow.pop %v541
        %v543 = vadd.f32 %v537, %v542
        %vm544 = vcmp.eq.f32.partialorder %v414, 11.0
        %v545 = vsel %vm544, %v448, %v539
        %v546 = vsub.f32 %v451, %v473
        %v547 = vmul.f32 %v546, 1.442695
        %v548 = vpow.pop %v547
        %v549 = vadd.f32 %v543, %v548
        %vm550 = vcmp.eq.f32.partialorder %v414, 12.0
        %v551 = vsel %vm550, %v451, %v545
        %v552 = vsub.f32 %v454, %v473
        %v553 = vmul.f32 %v552, 1.442695
        %v554 = vpow.pop %v553
        %v555 = vadd.f32 %v549, %v554
        %vm556 = vcmp.eq.f32.partialorder %v414, 13.0
        %v557 = vsel %vm556, %v454, %v551
        %v558 = vsub.f32 %v457, %v473
        %v559 = vmul.f32 %v558, 1.442695
        %v560 = vpow.pop %v559
        %v561 = vadd.f32 %v555, %v560
        %vm562 = vcmp.eq.f32.partialorder %v414, 14.0
        %v563 = vsel %vm562, %v457, %v557
        %v564 = vsub.f32 %v460, %v473
        %v565 = vmul.f32 %v564, 1.442695
        %v566 = vpow.pop %v565
        %v567 = vadd.f32 %v561, %v566
        %vm568 = vcmp.eq.f32.partialorder %v414, 15.0
        %v569 = vsel %vm568, %v460, %v563
        %v570 = vsub.f32 %v463, %v473
        %v571 = vmul.f32 %v570, 1.442695
        %v572 = vpow.pop %v571
        %v573 = vadd.f32 %v567, %v572
        %vm574 = vcmp.eq.f32.partialorder %v414, 16.0
        %v575 = vsel %vm574, %v463, %v569
        %v576 = vsub.f32 %v466, %v473
        %v577 = vmul.f32 %v576, 1.442695
        %v578 = vpow.pop %v577
        %v579 = vadd.f32 %v573, %v578
        %vm580 = vcmp.eq.f32.partialorder %v414, 17.0
        %v581 = vsel %vm580, %v466, %v575
        %v582 = vsub.f32 %v469, %v473
        %v583 = vmul.f32 %v582, 1.442695
        %v584 = vpow.pop %v583
        %v585 = vadd.f32 %v579, %v584
        %vm586 = vcmp.eq.f32.partialorder %v414, 18.0
        %v587 = vsel %vm586, %v469, %v581
        %v588 = vsub.f32 %v472, %v473
        %v589 = vmul.f32 %v588, 1.442695
        %v590 = vpow.pop %v589
        %v591 = vadd.f32 %v585, %v590
        %vm592 = vcmp.eq.f32.partialorder %v414, 19.0
        %v593 = vsel %vm592, %v472, %v587
        %v594 = vsub.f32 %v473, %v593
        %v595 = vlog2.pop %v591
        %v596 = vmul.f32 %v595, 0.6931472
        %v597 = vadd.f32 %v594, %v596
        %s598 = scalar_lea.vmem %s239, 5 [#allocation9]
        %v599 = vld [vmem:[%s598] sm:$0x1]
        %v600 = vsel %vm274, %v597, 0.0
        %v601 = vadd.f32 %v599, %v600
        %602 = vst [vmem:[%s598] sm:$0x1] %v601
        %s603 = sand.u32 %s116, 1
        %s604 = scalar_lea.sflag [#allocation6], %s603
        %s605 = sand.u32 %s116, 1
        %s606 = smul.addr %s605, 6
        %s607 = scalar_lea.vmem [#allocation9], %s606
        // Predicated region
        $region41: #{tpu_custom_call.1} parent=27 // pred_check
          %p608 = pneg %p126
        $region42: #{tpu_custom_call.1} parent=27 // pred_check_branch
          %610 = sbr.rel (%p608) target = $region44
        $region43: #{tpu_custom_call.1} parent=27 // pred_region
          %s612 = ssub.s32 96, 96
          %613 = vsyncadd %s604, %s612
          %s614 = smul.addr %s33, 6
          %s615 = smul.addr %s32, 18
          %s616 = sadd.s32 %s614, %s615
          %s617 = smul.addr %s616, 16
          %s618 = scalar_lea.hbm %s3, %s617
          %s619 = sshll.u32 %s607, 4
          %s620 = int_to_ptr.vmem [resolvable:$true] %s619
          %625 = dma.vmem_to_hbm [thread:$0]  %s620, 96, %s618, %s604, 16, 16, 1
        $region44: #{tpu_custom_call.1} parent=27 // pred_fallthru
          _
      $region28: #{tpu_custom_call.1} parent=5 // pred_fallthru
        _
      %p626 = scmp.le.s32.totalorder 2, %s22
      // Predicated region
      $region45: #{tpu_custom_call.1} parent=5 // pred_check
        %p627 = pneg %p626
      $region46: #{tpu_custom_call.1} parent=5 // pred_check_branch
        %629 = sbr.rel (%p627) target = $region48
      $region47: #{tpu_custom_call.1} parent=5 // pred_region
        %s630 = ssub.s32 %s22, 2
        // Predicated region
        $region49: #{tpu_custom_call.1} parent=47 // pred_check
          %p631 = pneg %p132
        $region50: #{tpu_custom_call.1} parent=47 // pred_check_branch
          %633 = sbr.rel (%p631) target = $region52
        $region51: #{tpu_custom_call.1} parent=47 // pred_region
          %s634 = sand.u32 %s117, 1
          %s635 = scalar_lea.sflag [#allocation6], %s634
          %s636 = sand.u32 %s117, 1
          %s637 = smul.addr %s636, 6
          %s638 = scalar_lea.vmem [#allocation9], %s637
          %639 = dma.done %s635, 96
        $region52: #{tpu_custom_call.1} parent=47 // pred_fallthru
          _
      $region48: #{tpu_custom_call.1} parent=5 // pred_fallthru
        _
    $region6: #{tpu_custom_call.1} parent=1 // loop_footer
      %s26 = sadd.s32 1, %s22
    $region7: #{tpu_custom_call.1} parent=1 // loop_footer_branch
      %21 = sbr.rel target = $region3
    $region8: #{tpu_custom_call.1} parent=1 // loop_exit
      _
    %640 = vsyncpa [#allocation5], 1
    %s641 = scalar_lea.sflag [#allocation5], 1
    %642 = vsyncpa %s641, 1
    %643 = vsyncpa [#allocation8], 1
    %s644 = scalar_lea.sflag [#allocation8], 1
    %645 = vsyncpa %s644, 1
    %646 = vsyncpa [#allocation6], 1
    %s647 = scalar_lea.sflag [#allocation6], 1
    %648 = vsyncpa %s647, 1

</llo_original>
